<compile_context>
chip_gen: v5e
topology: v5e:2x2
jax: 0.10.0
libtpu: 0.0.40
codegen_flags: <defaults>
</compile_context>

<pallas_src>
import functools
import math

import jax
import jax.numpy as jnp
from jax.experimental import pallas as pl
from jax.experimental.pallas import tpu as pltpu


NEG_INF = -1e9  # matches torch masked_fill(-1000000000.0)


def _mha_ci_kernel(*refs, scale, p_drop, training, liw, af, has_mask):
    if has_mask:
        (xq_ref, xk_ref, xv_ref, xkf_ref, xvf_ref,
         wq_ref, bq_ref, wk_ref, bk_ref, wv_ref, bv_ref,
         wo_ref, bo_ref, mask_ref, seed_ref, o_ref, acc_ref) = refs
    else:
        (xq_ref, xk_ref, xv_ref, xkf_ref, xvf_ref,
         wq_ref, bq_ref, wk_ref, bk_ref, wv_ref, bv_ref,
         wo_ref, bo_ref, seed_ref, o_ref, acc_ref) = refs
        mask_ref = None

    hh = pl.program_id(1)

    @pl.when(hh == 0)
    def _init():
        acc_ref[...] = jnp.zeros_like(acc_ref)

    f32 = jnp.float32

    def proj(x_ref, w_ref, b_ref):
        # (S, D) @ (D, d_k) + (1, d_k) -> (S, d_k); f32 accumulate on the MXU.
        return (jnp.dot(x_ref[0].astype(f32), w_ref[0].astype(f32),
                        preferred_element_type=f32)
                + b_ref[0].astype(f32))

    q = proj(xq_ref, wq_ref, bq_ref)
    k = proj(xk_ref, wk_ref, bk_ref)
    v = proj(xv_ref, wv_ref, bv_ref)
    kf = proj(xkf_ref, wk_ref, bk_ref)   # K of the paired ("flipped") batch
    vf = proj(xvf_ref, wv_ref, bv_ref)   # V of the paired ("flipped") batch

    if has_mask:
        masked_out = mask_ref[0] == 0    # (S, S); same mask for both paths

    if training and p_drop > 0.0:
        # Per-(batch, head) seed so grid tiles never repeat the dropout mask.
        pltpu.prng_seed(seed_ref[0]
                        + pl.program_id(0) * pl.num_programs(1) + hh)
        drop_thresh = jnp.uint32(min(int(round(p_drop * 2.0 ** 32)),
                                     2 ** 32 - 1))
        inv_keep = f32(1.0 / (1.0 - p_drop))

    def attend(kk, vv):
        s = jnp.einsum("qd,kd->qk", q, kk,
                       preferred_element_type=f32) * scale        # (S, S)
        if has_mask:
            s = jnp.where(masked_out, f32(NEG_INF), s)
        s_max = jnp.max(s, axis=-1, keepdims=True)
        e = jnp.exp(s - s_max)
        denom = jnp.sum(e, axis=-1, keepdims=True)
        p_attn = e * pl.reciprocal(denom)                          # exact
        if training and p_drop > 0.0:
            # TODO(synk): RNG stream differs from torch.nn.Dropout; semantics
            # (keep with prob 1-p, scale by 1/(1-p)) match.
            bits = pltpu.bitcast(pltpu.prng_random_bits(p_attn.shape),
                                 jnp.uint32)
            p_attn = jnp.where(bits >= drop_thresh,
                               p_attn * inv_keep, f32(0.0))
        return jnp.dot(p_attn, vv, preferred_element_type=f32)     # (S, d_k)

    # TODO(synk): self.attn (stacked p_attn maps) is module state, not part of
    # the forward output; it is computed here but not written back to HBM.
    ctx_homo = attend(k, v)
    ctx_heter = attend(kf, vf)

    if af == "relu":
        heter = jnp.maximum(ctx_heter, 0.0)
    elif af == "tanh":
        heter = jnp.tanh(ctx_heter)
    else:  # "linear"
        heter = ctx_heter

    combine = ctx_homo + f32(liw) * heter                          # (S, d_k)

    # Per-head row-slice of the output projection, accumulated across the
    # head ("arbitrary") grid axis in the resident f32 scratch.
    acc_ref[...] += jnp.dot(combine, wo_ref[0].astype(f32),
                            preferred_element_type=f32)

    @pl.when(hh == pl.num_programs(1) - 1)
    def _finalize():
        o_ref[0] = (acc_ref[...] + bo_ref[...].astype(f32)).astype(o_ref.dtype)


def mha_ci_forward(query, key, value, params, *, h, mask=None,
                   dropout_p=0.1, training=False, seed=0,
                   lang_inter_weight=0.0, lang_inter_af="relu"):
    """Fused forward of MultiHeadedAttention_CI.

    query/key/value: (nbatches, seq, d_model); nbatches must be even (the
    module pairs batches (2i, 2i+1) for the cross-lingual flip).
    params: (Wq, bq, Wk, bk, Wv, bv, Wo, bo); W in x@W layout (== torch W.T).
    mask: optional (nbatches, seq, seq) with 0 = masked (broadcast over heads,
    same as torch's mask.unsqueeze(1)).
    """
    Wq, bq, Wk, bk, Wv, bv, Wo, bo = params
    nb, S, D = query.shape
    assert nb % 2 == 0, "MultiHeadedAttention_CI needs an even batch count"
    assert D % h == 0
    d_k = D // h

    # One-time head-major layout plumbing so every BlockSpec keeps its last
    # two dims equal to the full array dims (lane/sublane friendly).
    def split_w(W):           # (D, D) -> (h, D, d_k)
        return W.reshape(D, h, d_k).transpose(1, 0, 2)

    def split_b(b):           # (D,) -> (h, 1, d_k)
        return b.reshape(h, 1, d_k)

    wq_h, wk_h, wv_h = split_w(Wq), split_w(Wk), split_w(Wv)
    bq_h, bk_h, bv_h = split_b(bq), split_b(bk), split_b(bv)
    wo_h = Wo.reshape(h, d_k, D)          # per-head row slice of Wo
    bo2 = bo.reshape(1, D)
    seed_arr = jnp.asarray([seed], dtype=jnp.int32)

    has_mask = mask is not None
    kernel = functools.partial(
        _mha_ci_kernel, scale=1.0 / math.sqrt(d_k), p_drop=float(dropout_p),
        training=bool(training), liw=float(lang_inter_weight),
        af=lang_inter_af, has_mask=has_mask)

    def flip(b):              # partner batch of the (2i, 2i+1) pair
        return b + 1 - 2 * (b % 2)

    x_spec = pl.BlockSpec((1, S, D), lambda b, hh: (b, 0, 0))
    xf_spec = pl.BlockSpec((1, S, D), lambda b, hh: (flip(b), 0, 0))
    w_spec = pl.BlockSpec((1, D, d_k), lambda b, hh: (hh, 0, 0))
    bias_spec = pl.BlockSpec((1, 1, d_k), lambda b, hh: (hh, 0, 0))
    wo_spec = pl.BlockSpec((1, d_k, D), lambda b, hh: (hh, 0, 0))
    bo_spec = pl.BlockSpec((1, D), lambda b, hh: (0, 0))
    out_spec = pl.BlockSpec((1, S, D), lambda b, hh: (b, 0, 0))

    in_specs = [x_spec, x_spec, x_spec, xf_spec, xf_spec,
                w_spec, bias_spec, w_spec, bias_spec, w_spec, bias_spec,
                wo_spec, bo_spec]
    inputs = [query, key, value, key, value,
              wq_h, bq_h, wk_h, bk_h, wv_h, bv_h, wo_h, bo2]
    if has_mask:
        in_specs.append(pl.BlockSpec((1, S, S), lambda b, hh: (b, 0, 0)))
        inputs.append(mask.astype(jnp.int32))
    in_specs.append(pl.BlockSpec(memory_space=pltpu.MemorySpace.SMEM))
    inputs.append(seed_arr)

    # Advisory cost estimate for XLA's scheduler.
    flops = 2 * nb * h * S * D * d_k * 6 + 2 * nb * h * S * S * d_k * 4
    bytes_accessed = 4 * (6 * nb * S * D + 4 * D * D + 4 * D + nb * S * D
                          + (nb * S * S if has_mask else 0))
    cost = pl.CostEstimate(flops=flops, transcendentals=2 * nb * h * S * S,
                           bytes_accessed=bytes_accessed)

    return pl.pallas_call(
        kernel,
        out_shape=jax.ShapeDtypeStruct((nb, S, D), query.dtype),
        grid_spec=pltpu.PrefetchScalarGridSpec(
            num_scalar_prefetch=0,
            grid=(nb, h),                    # reduction (head) axis last
            in_specs=in_specs,
            out_specs=out_spec,
            scratch_shapes=[pltpu.VMEM((S, D), jnp.float32)]),
        compiler_params=pltpu.CompilerParams(
            dimension_semantics=("parallel", "arbitrary")),
        cost_estimate=cost,
    )(*inputs)


def mha_ci_reference(query, key, value, params, *, h, mask=None,
                     lang_inter_weight=0.0, lang_inter_af="relu"):
    """Pure-JAX reference mirroring the PyTorch forward."""
    Wq, bq, Wk, bk, Wv, bv, Wo, bo = params
    nb, S, D = query.shape
    d_k = D // h
    hi = jax.lax.Precision.HIGHEST

    def proj(x, W, b):
        y = jnp.dot(x, W, precision=hi) + b
        return y.reshape(nb, S, h, d_k).transpose(0, 2, 1, 3)

    q = proj(query, Wq, bq)
    k = proj(key, Wk, bk)
    v = proj(value, Wv, bv)
    scale = 1.0 / math.sqrt(d_k)

    def attn_probs(qq, kk):
        s = jnp.einsum("bhqd,bhkd->bhqk", qq, kk, precision=hi) * scale
        if mask is not None:
            s = jnp.where(mask[:, None] == 0, NEG_INF, s)
        return jax.nn.softmax(s, axis=-1)

    p1 = attn_probs(q, k)
    ctx_homo = jnp.einsum("bhqk,bhkd->bhqd", p1, v, precision=hi)
    kf = jnp.flip(k.reshape(nb // 2, 2, h, S, d_k), axis=1).reshape(nb, h, S, d_k)
    vf = jnp.flip(v.reshape(nb // 2, 2, h, S, d_k), axis=1).reshape(nb, h, S, d_k)
    p2 = attn_probs(q, kf)
    ctx_heter = jnp.einsum("bhqk,bhkd->bhqd", p2, vf, precision=hi)

    if lang_inter_af == "relu":
        hcomb = jnp.maximum(ctx_heter, 0.0)
    elif lang_inter_af == "tanh":
        hcomb = jnp.tanh(ctx_heter)
    else:
        hcomb = ctx_heter
    comb = ctx_homo + lang_inter_weight * hcomb
    x = comb.transpose(0, 2, 1, 3).reshape(nb, S, D)
    return jnp.dot(x, Wo, precision=hi) + bo


if __name__ == "__main__":
    nb, S, h, D = 2, 8, 4, 32          # nbatches, seq, heads, d_model (d_k=8)
    key0 = jax.random.PRNGKey(0)
    keys = jax.random.split(key0, 11)

    query = jax.random.normal(keys[0], (nb, S, D), jnp.float32)
    key_in = jax.random.normal(keys[1], (nb, S, D), jnp.float32)
    value = jax.random.normal(keys[2], (nb, S, D), jnp.float32)

    def lin_params(kw, kb):
        W = 0.05 * jax.random.normal(kw, (D, D), jnp.float32)
        b = 0.05 * jax.random.normal(kb, (D,), jnp.float32)
        return W, b

    Wq, bq = lin_params(keys[3], keys[4])
    Wk, bk = lin_params(keys[5], keys[6])
    Wv, bv = lin_params(keys[7], keys[8])
    Wo, bo = lin_params(keys[9], keys[10])
    params = (Wq, bq, Wk, bk, Wv, bv, Wo, bo)

    liw, af = 0.5, "relu"

    # 1) eval mode (nn.Dropout identity), no mask.
    out = mha_ci_forward(query, key_in, value, params, h=h, mask=None,
                         dropout_p=0.1, training=False,
                         lang_inter_weight=liw, lang_inter_af=af)
    out = jax.block_until_ready(out)
    ref = mha_ci_reference(query, key_in, value, params, h=h, mask=None,
                           lang_inter_weight=liw, lang_inter_af=af)
    assert out.shape == (nb, S, D) and out.dtype == query.dtype
    err = float(jnp.max(jnp.abs(out - ref)))
    assert err < 2e-3, f"no-mask max abs err {err}"

    # 2) eval mode with a padding mask (last two key positions of batch 1).
    mask = jnp.ones((nb, S, S), jnp.int32).at[1, :, S - 2:].set(0)
    out_m = mha_ci_forward(query, key_in, value, params, h=h, mask=mask,
                           dropout_p=0.1, training=False,
                           lang_inter_weight=liw, lang_inter_af=af)
    out_m = jax.block_until_ready(out_m)
    ref_m = mha_ci_reference(query, key_in, value, params, h=h, mask=mask,
                             lang_inter_weight=liw, lang_inter_af=af)
    err_m = float(jnp.max(jnp.abs(out_m - ref_m)))
    assert err_m < 2e-3, f"masked max abs err {err_m}"

    print("KERNEL_OK")
</pallas_src>

<mosaic_0001>
module attributes {stable_mosaic.version = 11 : i64} {
  func.func @_mha_ci_kernel(%arg0: i32, %arg1: i32, %arg2: memref<1x8x32xf32, #tpu.memory_space<vmem>>, %arg3: memref<1x8x32xf32, #tpu.memory_space<vmem>>, %arg4: memref<1x8x32xf32, #tpu.memory_space<vmem>>, %arg5: memref<1x8x32xf32, #tpu.memory_space<vmem>>, %arg6: memref<1x8x32xf32, #tpu.memory_space<vmem>>, %arg7: memref<1x32x8xf32, #tpu.memory_space<vmem>>, %arg8: memref<1x1x8xf32, #tpu.memory_space<vmem>>, %arg9: memref<1x32x8xf32, #tpu.memory_space<vmem>>, %arg10: memref<1x1x8xf32, #tpu.memory_space<vmem>>, %arg11: memref<1x32x8xf32, #tpu.memory_space<vmem>>, %arg12: memref<1x1x8xf32, #tpu.memory_space<vmem>>, %arg13: memref<1x8x32xf32, #tpu.memory_space<vmem>>, %arg14: memref<1x32xf32, #tpu.memory_space<vmem>>, %arg15: memref<1xi32, #tpu.memory_space<smem>>, %arg16: memref<1x8x32xf32, #tpu.memory_space<vmem>>, %arg17: memref<8x32xf32, #tpu.memory_space<vmem>>) attributes {dimension_semantics = [#tpu.dimension_semantics<parallel>, #tpu.dimension_semantics<arbitrary>], iteration_bounds = array<i64: 2, 4>, scalar_prefetch = 0 : i64, scratch_operands = 1 : i64, tpu.core_type = #tpu.core_type<tc>, window_params = [{transform_indices = @transform_0, window_bounds = array<i64: 1, 8, 32>}, {transform_indices = @transform_1, window_bounds = array<i64: 1, 8, 32>}, {transform_indices = @transform_2, window_bounds = array<i64: 1, 8, 32>}, {transform_indices = @transform_3, window_bounds = array<i64: 1, 8, 32>}, {transform_indices = @transform_4, window_bounds = array<i64: 1, 8, 32>}, {transform_indices = @transform_5, window_bounds = array<i64: 1, 32, 8>}, {transform_indices = @transform_6, window_bounds = array<i64: 1, 1, 8>}, {transform_indices = @transform_7, window_bounds = array<i64: 1, 32, 8>}, {transform_indices = @transform_8, window_bounds = array<i64: 1, 1, 8>}, {transform_indices = @transform_9, window_bounds = array<i64: 1, 32, 8>}, {transform_indices = @transform_10, window_bounds = array<i64: 1, 1, 8>}, {transform_indices = @transform_11, window_bounds = array<i64: 1, 8, 32>}, {pipeline_mode = #tpu.pipeline_mode<synchronous>, transform_indices = @transform_12, window_bounds = array<i64: 1, 32>}, {transform_indices = @transform_13, window_bounds = array<i64: 1>}, {transform_indices = @transform_14, window_bounds = array<i64: 1, 8, 32>}]} {
    %c0_i32 = arith.constant 0 : i32
    %0 = arith.cmpi eq, %arg1, %c0_i32 : i32
    %1 = arith.extui %0 : i1 to i32
    %c0_i32_0 = arith.constant 0 : i32
    %2 = arith.cmpi ne, %1, %c0_i32_0 : i32
    scf.if %2 {
      %cst_70 = arith.constant 0.000000e+00 : f32
      %90 = vector.broadcast %cst_70 : f32 to vector<8x32xf32>
      %c0_71 = arith.constant 0 : index
      %c0_72 = arith.constant 0 : index
      %91 = vector.load %arg17[%c0_71, %c0_72] : memref<8x32xf32, #tpu.memory_space<vmem>>, vector<8x32xf32>
      tpu.vector_store %arg17[%c0_71, %c0_72], %90 {strides = array<i32>} : memref<8x32xf32, #tpu.memory_space<vmem>>, vector<8x32xf32>,
    } else {
    }
    %c0 = arith.constant 0 : index
    %c0_1 = arith.constant 0 : index
    %c0_2 = arith.constant 0 : index
    %3 = vector.load %arg2[%c0, %c0_1, %c0_2] : memref<1x8x32xf32, #tpu.memory_space<vmem>>, vector<1x8x32xf32>
    %4 = vector.shape_cast %3 : vector<1x8x32xf32> to vector<8x32xf32>
    %c0_3 = arith.constant 0 : index
    %c0_4 = arith.constant 0 : index
    %c0_5 = arith.constant 0 : index
    %5 = vector.load %arg7[%c0_3, %c0_4, %c0_5] : memref<1x32x8xf32, #tpu.memory_space<vmem>>, vector<1x32x8xf32>
    %6 = vector.shape_cast %5 : vector<1x32x8xf32> to vector<32x8xf32>
    %cst = arith.constant dense<0.000000e+00> : vector<8x8xf32>
    %7 = tpu.matmul %4, %6, %cst {dimension_numbers = #tpu.dot_dimension_numbers<[1], [0], [0], [1], [0, 0, 1, 1], [], []>} : vector<8x32xf32>, vector<32x8xf32>, vector<8x8xf32> -> vector<8x8xf32>
    %c0_6 = arith.constant 0 : index
    %c0_7 = arith.constant 0 : index
    %c0_8 = arith.constant 0 : index
    %8 = vector.load %arg8[%c0_6, %c0_7, %c0_8] : memref<1x1x8xf32, #tpu.memory_space<vmem>>, vector<1x1x8xf32>
    %9 = vector.shape_cast %8 : vector<1x1x8xf32> to vector<1x8xf32>
    %10 = vector.broadcast %9 : vector<1x8xf32> to vector<8x8xf32>
    %11 = arith.addf %7, %10 : vector<8x8xf32>
    %c0_9 = arith.constant 0 : index
    %c0_10 = arith.constant 0 : index
    %c0_11 = arith.constant 0 : index
    %12 = vector.load %arg3[%c0_9, %c0_10, %c0_11] : memref<1x8x32xf32, #tpu.memory_space<vmem>>, vector<1x8x32xf32>
    %13 = vector.shape_cast %12 : vector<1x8x32xf32> to vector<8x32xf32>
    %c0_12 = arith.constant 0 : index
    %c0_13 = arith.constant 0 : index
    %c0_14 = arith.constant 0 : index
    %14 = vector.load %arg9[%c0_12, %c0_13, %c0_14] : memref<1x32x8xf32, #tpu.memory_space<vmem>>, vector<1x32x8xf32>
    %15 = vector.shape_cast %14 : vector<1x32x8xf32> to vector<32x8xf32>
    %cst_15 = arith.constant dense<0.000000e+00> : vector<8x8xf32>
    %16 = tpu.matmul %13, %15, %cst_15 {dimension_numbers = #tpu.dot_dimension_numbers<[1], [0], [0], [1], [0, 0, 1, 1], [], []>} : vector<8x32xf32>, vector<32x8xf32>, vector<8x8xf32> -> vector<8x8xf32>
    %c0_16 = arith.constant 0 : index
    %c0_17 = arith.constant 0 : index
    %c0_18 = arith.constant 0 : index
    %17 = vector.load %arg10[%c0_16, %c0_17, %c0_18] : memref<1x1x8xf32, #tpu.memory_space<vmem>>, vector<1x1x8xf32>
    %18 = vector.shape_cast %17 : vector<1x1x8xf32> to vector<1x8xf32>
    %19 = vector.broadcast %18 : vector<1x8xf32> to vector<8x8xf32>
    %20 = arith.addf %16, %19 : vector<8x8xf32>
    %c0_19 = arith.constant 0 : index
    %c0_20 = arith.constant 0 : index
    %c0_21 = arith.constant 0 : index
    %21 = vector.load %arg4[%c0_19, %c0_20, %c0_21] : memref<1x8x32xf32, #tpu.memory_space<vmem>>, vector<1x8x32xf32>
    %22 = vector.shape_cast %21 : vector<1x8x32xf32> to vector<8x32xf32>
    %c0_22 = arith.constant 0 : index
    %c0_23 = arith.constant 0 : index
    %c0_24 = arith.constant 0 : index
    %23 = vector.load %arg11[%c0_22, %c0_23, %c0_24] : memref<1x32x8xf32, #tpu.memory_space<vmem>>, vector<1x32x8xf32>
    %24 = vector.shape_cast %23 : vector<1x32x8xf32> to vector<32x8xf32>
    %cst_25 = arith.constant dense<0.000000e+00> : vector<8x8xf32>
    %25 = tpu.matmul %22, %24, %cst_25 {dimension_numbers = #tpu.dot_dimension_numbers<[1], [0], [0], [1], [0, 0, 1, 1], [], []>} : vector<8x32xf32>, vector<32x8xf32>, vector<8x8xf32> -> vector<8x8xf32>
    %c0_26 = arith.constant 0 : index
    %c0_27 = arith.constant 0 : index
    %c0_28 = arith.constant 0 : index
    %26 = vector.load %arg12[%c0_26, %c0_27, %c0_28] : memref<1x1x8xf32, #tpu.memory_space<vmem>>, vector<1x1x8xf32>
    %27 = vector.shape_cast %26 : vector<1x1x8xf32> to vector<1x8xf32>
    %28 = vector.broadcast %27 : vector<1x8xf32> to vector<8x8xf32>
    %29 = arith.addf %25, %28 : vector<8x8xf32>
    %c0_29 = arith.constant 0 : index
    %c0_30 = arith.constant 0 : index
    %c0_31 = arith.constant 0 : index
    %30 = vector.load %arg5[%c0_29, %c0_30, %c0_31] : memref<1x8x32xf32, #tpu.memory_space<vmem>>, vector<1x8x32xf32>
    %31 = vector.shape_cast %30 : vector<1x8x32xf32> to vector<8x32xf32>
    %c0_32 = arith.constant 0 : index
    %c0_33 = arith.constant 0 : index
    %c0_34 = arith.constant 0 : index
    %32 = vector.load %arg9[%c0_32, %c0_33, %c0_34] : memref<1x32x8xf32, #tpu.memory_space<vmem>>, vector<1x32x8xf32>
    %33 = vector.shape_cast %32 : vector<1x32x8xf32> to vector<32x8xf32>
    %cst_35 = arith.constant dense<0.000000e+00> : vector<8x8xf32>
    %34 = tpu.matmul %31, %33, %cst_35 {dimension_numbers = #tpu.dot_dimension_numbers<[1], [0], [0], [1], [0, 0, 1, 1], [], []>} : vector<8x32xf32>, vector<32x8xf32>, vector<8x8xf32> -> vector<8x8xf32>
    %c0_36 = arith.constant 0 : index
    %c0_37 = arith.constant 0 : index
    %c0_38 = arith.constant 0 : index
    %35 = vector.load %arg10[%c0_36, %c0_37, %c0_38] : memref<1x1x8xf32, #tpu.memory_space<vmem>>, vector<1x1x8xf32>
    %36 = vector.shape_cast %35 : vector<1x1x8xf32> to vector<1x8xf32>
    %37 = vector.broadcast %36 : vector<1x8xf32> to vector<8x8xf32>
    %38 = arith.addf %34, %37 : vector<8x8xf32>
    %c0_39 = arith.constant 0 : index
    %c0_40 = arith.constant 0 : index
    %c0_41 = arith.constant 0 : index
    %39 = vector.load %arg6[%c0_39, %c0_40, %c0_41] : memref<1x8x32xf32, #tpu.memory_space<vmem>>, vector<1x8x32xf32>
    %40 = vector.shape_cast %39 : vector<1x8x32xf32> to vector<8x32xf32>
    %c0_42 = arith.constant 0 : index
    %c0_43 = arith.constant 0 : index
    %c0_44 = arith.constant 0 : index
    %41 = vector.load %arg11[%c0_42, %c0_43, %c0_44] : memref<1x32x8xf32, #tpu.memory_space<vmem>>, vector<1x32x8xf32>
    %42 = vector.shape_cast %41 : vector<1x32x8xf32> to vector<32x8xf32>
    %cst_45 = arith.constant dense<0.000000e+00> : vector<8x8xf32>
    %43 = tpu.matmul %40, %42, %cst_45 {dimension_numbers = #tpu.dot_dimension_numbers<[1], [0], [0], [1], [0, 0, 1, 1], [], []>} : vector<8x32xf32>, vector<32x8xf32>, vector<8x8xf32> -> vector<8x8xf32>
    %c0_46 = arith.constant 0 : index
    %c0_47 = arith.constant 0 : index
    %c0_48 = arith.constant 0 : index
    %44 = vector.load %arg12[%c0_46, %c0_47, %c0_48] : memref<1x1x8xf32, #tpu.memory_space<vmem>>, vector<1x1x8xf32>
    %45 = vector.shape_cast %44 : vector<1x1x8xf32> to vector<1x8xf32>
    %46 = vector.broadcast %45 : vector<1x8xf32> to vector<8x8xf32>
    %47 = arith.addf %43, %46 : vector<8x8xf32>
    "tpu.trace_start"() <{level = 10 : i32, message = "qd,kd->qk"}> : () -> ()
    %cst_49 = arith.constant dense<0.000000e+00> : vector<8x8xf32>
    %48 = tpu.matmul %11, %20, %cst_49 {dimension_numbers = #tpu.dot_dimension_numbers<[1], [1], [0], [0], [0, 0, 1, 0], [], []>} : vector<8x8xf32>, vector<8x8xf32>, vector<8x8xf32> -> vector<8x8xf32>
    "tpu.trace_stop"() : () -> ()
    %cst_50 = arith.constant 0.353553385 : f32
    %49 = vector.broadcast %cst_50 : f32 to vector<8x8xf32>
    %50 = arith.mulf %48, %49 : vector<8x8xf32>
    %cst_51 = arith.constant dense<0xFF800000> : vector<8xf32>
    %51 = vector.multi_reduction <maximumf>, %50, %cst_51 [1] : vector<8x8xf32> to vector<8xf32>
    %52 = vector.shape_cast %51 : vector<8xf32> to vector<8x1xf32>
    %53 = vector.broadcast %52 : vector<8x1xf32> to vector<8x8xf32>
    %54 = arith.subf %50, %53 : vector<8x8xf32>
    %55 = math.exp %54 : vector<8x8xf32>
    %cst_52 = arith.constant dense<0.000000e+00> : vector<8xf32>
    %56 = vector.multi_reduction <add>, %55, %cst_52 [1] : vector<8x8xf32> to vector<8xf32>
    %57 = vector.shape_cast %56 : vector<8xf32> to vector<8x1xf32>
    %58 = tpu.reciprocal %57 : vector<8x1xf32> -> vector<8x1xf32>
    %59 = vector.broadcast %58 : vector<8x1xf32> to vector<8x8xf32>
    %60 = arith.mulf %55, %59 : vector<8x8xf32>
    %cst_53 = arith.constant dense<0.000000e+00> : vector<8x8xf32>
    %61 = tpu.matmul %60, %29, %cst_53 {dimension_numbers = #tpu.dot_dimension_numbers<[1], [0], [0], [1], [0, 0, 1, 1], [], []>} : vector<8x8xf32>, vector<8x8xf32>, vector<8x8xf32> -> vector<8x8xf32>
    "tpu.trace_start"() <{level = 10 : i32, message = "qd,kd->qk"}> : () -> ()
    %cst_54 = arith.constant dense<0.000000e+00> : vector<8x8xf32>
    %62 = tpu.matmul %11, %38, %cst_54 {dimension_numbers = #tpu.dot_dimension_numbers<[1], [1], [0], [0], [0, 0, 1, 0], [], []>} : vector<8x8xf32>, vector<8x8xf32>, vector<8x8xf32> -> vector<8x8xf32>
    "tpu.trace_stop"() : () -> ()
    %cst_55 = arith.constant 0.353553385 : f32
    %63 = vector.broadcast %cst_55 : f32 to vector<8x8xf32>
    %64 = arith.mulf %62, %63 : vector<8x8xf32>
    %cst_56 = arith.constant dense<0xFF800000> : vector<8xf32>
    %65 = vector.multi_reduction <maximumf>, %64, %cst_56 [1] : vector<8x8xf32> to vector<8xf32>
    %66 = vector.shape_cast %65 : vector<8xf32> to vector<8x1xf32>
    %67 = vector.broadcast %66 : vector<8x1xf32> to vector<8x8xf32>
    %68 = arith.subf %64, %67 : vector<8x8xf32>
    %69 = math.exp %68 : vector<8x8xf32>
    %cst_57 = arith.constant dense<0.000000e+00> : vector<8xf32>
    %70 = vector.multi_reduction <add>, %69, %cst_57 [1] : vector<8x8xf32> to vector<8xf32>
    %71 = vector.shape_cast %70 : vector<8xf32> to vector<8x1xf32>
    %72 = tpu.reciprocal %71 : vector<8x1xf32> -> vector<8x1xf32>
    %73 = vector.broadcast %72 : vector<8x1xf32> to vector<8x8xf32>
    %74 = arith.mulf %69, %73 : vector<8x8xf32>
    %cst_58 = arith.constant dense<0.000000e+00> : vector<8x8xf32>
    %75 = tpu.matmul %74, %47, %cst_58 {dimension_numbers = #tpu.dot_dimension_numbers<[1], [0], [0], [1], [0, 0, 1, 1], [], []>} : vector<8x8xf32>, vector<8x8xf32>, vector<8x8xf32> -> vector<8x8xf32>
    %cst_59 = arith.constant 0.000000e+00 : f32
    %76 = vector.broadcast %cst_59 : f32 to vector<8x8xf32>
    %77 = arith.maximumf %75, %76 : vector<8x8xf32>
    %cst_60 = arith.constant 5.000000e-01 : f32
    %78 = vector.broadcast %cst_60 : f32 to vector<8x8xf32>
    %79 = arith.mulf %78, %77 : vector<8x8xf32>
    %80 = arith.addf %61, %79 : vector<8x8xf32>
    %c0_61 = arith.constant 0 : index
    %c0_62 = arith.constant 0 : index
    %81 = vector.load %arg17[%c0_61, %c0_62] : memref<8x32xf32, #tpu.memory_space<vmem>>, vector<8x32xf32>
    %c0_63 = arith.constant 0 : index
    %c0_64 = arith.constant 0 : index
    %c0_65 = arith.constant 0 : index
    %82 = vector.load %arg13[%c0_63, %c0_64, %c0_65] : memref<1x8x32xf32, #tpu.memory_space<vmem>>, vector<1x8x32xf32>
    %83 = vector.shape_cast %82 : vector<1x8x32xf32> to vector<8x32xf32>
    %cst_66 = arith.constant dense<0.000000e+00> : vector<8x32xf32>
    %84 = tpu.matmul %80, %83, %cst_66 {dimension_numbers = #tpu.dot_dimension_numbers<[1], [0], [0], [1], [0, 0, 1, 1], [], []>} : vector<8x8xf32>, vector<8x32xf32>, vector<8x32xf32> -> vector<8x32xf32>
    %85 = arith.addf %81, %84 : vector<8x32xf32>
    %c0_67 = arith.constant 0 : index
    %c0_68 = arith.constant 0 : index
    %86 = vector.load %arg17[%c0_67, %c0_68] : memref<8x32xf32, #tpu.memory_space<vmem>>, vector<8x32xf32>
    tpu.vector_store %arg17[%c0_67, %c0_68], %85 {strides = array<i32>} : memref<8x32xf32, #tpu.memory_space<vmem>>, vector<8x32xf32>,
    %c3_i32 = arith.constant 3 : i32
    %87 = arith.cmpi eq, %arg1, %c3_i32 : i32
    %88 = arith.extui %87 : i1 to i32
    %c0_i32_69 = arith.constant 0 : i32
    %89 = arith.cmpi ne, %88, %c0_i32_69 : i32
    scf.if %89 {
      %c0_70 = arith.constant 0 : index
      %c0_71 = arith.constant 0 : index
      %90 = vector.load %arg17[%c0_70, %c0_71] : memref<8x32xf32, #tpu.memory_space<vmem>>, vector<8x32xf32>
      %c0_72 = arith.constant 0 : index
      %c0_73 = arith.constant 0 : index
      %91 = vector.load %arg14[%c0_72, %c0_73] : memref<1x32xf32, #tpu.memory_space<vmem>>, vector<1x32xf32>
      %92 = vector.broadcast %91 : vector<1x32xf32> to vector<8x32xf32>
      %93 = arith.addf %90, %92 : vector<8x32xf32>
      %c0_74 = arith.constant 0 : index
      %c0_75 = arith.constant 0 : index
      %c0_76 = arith.constant 0 : index
      %94 = vector.load %arg16[%c0_74, %c0_75, %c0_76] : memref<1x8x32xf32, #tpu.memory_space<vmem>>, vector<1x8x32xf32>
      %95 = vector.shape_cast %94 : vector<1x8x32xf32> to vector<8x32xf32>
      %96 = vector.shape_cast %93 : vector<8x32xf32> to vector<1x8x32xf32>
      tpu.vector_store %arg16[%c0_74, %c0_75, %c0_76], %96 {strides = array<i32>} : memref<1x8x32xf32, #tpu.memory_space<vmem>>, vector<1x8x32xf32>,
    } else {
    }
    return
  }
  func.func @transform_0(%arg0: i32, %arg1: i32) -> (i32, i32, i32) {
    %c0_i32 = arith.constant 0 : i32
    %c0_i32_0 = arith.constant 0 : i32
    %c0_i32_1 = arith.constant 0 : i32
    return %arg0, %c0_i32, %c0_i32_0 : i32, i32, i32
  }
  func.func @transform_1(%arg0: i32, %arg1: i32) -> (i32, i32, i32) {
    %c0_i32 = arith.constant 0 : i32
    %c0_i32_0 = arith.constant 0 : i32
    %c0_i32_1 = arith.constant 0 : i32
    return %arg0, %c0_i32, %c0_i32_0 : i32, i32, i32
  }
  func.func @transform_2(%arg0: i32, %arg1: i32) -> (i32, i32, i32) {
    %c0_i32 = arith.constant 0 : i32
    %c0_i32_0 = arith.constant 0 : i32
    %c0_i32_1 = arith.constant 0 : i32
    return %arg0, %c0_i32, %c0_i32_0 : i32, i32, i32
  }
  func.func @transform_3(%arg0: i32, %arg1: i32) -> (i32, i32, i32) {
    %c1_i32 = arith.constant 1 : i32
    %0 = arith.addi %arg0, %c1_i32 : i32
    %c2_i32 = arith.constant 2 : i32
    %c0_i32 = arith.constant 0 : i32
    %1 = arith.cmpi eq, %c2_i32, %c0_i32 : i32
    %c1_i32_0 = arith.constant 1 : i32
    %2 = arith.select %1, %c1_i32_0, %c2_i32 : i32
    %3 = arith.remsi %arg0, %2 : i32
    %c0_i32_1 = arith.constant 0 : i32
    %4 = arith.cmpi ne, %3, %c0_i32_1 : i32
    %c0_i32_2 = arith.constant 0 : i32
    %5 = arith.cmpi slt, %3, %c0_i32_2 : i32
    %c0_i32_3 = arith.constant 0 : i32
    %6 = arith.cmpi slt, %2, %c0_i32_3 : i32
    %7 = arith.xori %5, %6 : i1
    %8 = arith.andi %7, %4 : i1
    %9 = arith.addi %3, %2 : i32
    %10 = arith.select %8, %9, %3 : i32
    %c2_i32_4 = arith.constant 2 : i32
    %11 = arith.muli %c2_i32_4, %10 : i32
    %12 = arith.subi %0, %11 : i32
    %c0_i32_5 = arith.constant 0 : i32
    %c0_i32_6 = arith.constant 0 : i32
    %c0_i32_7 = arith.constant 0 : i32
    return %12, %c0_i32_5, %c0_i32_6 : i32, i32, i32
  }
  func.func @transform_4(%arg0: i32, %arg1: i32) -> (i32, i32, i32) {
    %c1_i32 = arith.constant 1 : i32
    %0 = arith.addi %arg0, %c1_i32 : i32
    %c2_i32 = arith.constant 2 : i32
    %c0_i32 = arith.constant 0 : i32
    %1 = arith.cmpi eq, %c2_i32, %c0_i32 : i32
    %c1_i32_0 = arith.constant 1 : i32
    %2 = arith.select %1, %c1_i32_0, %c2_i32 : i32
    %3 = arith.remsi %arg0, %2 : i32
    %c0_i32_1 = arith.constant 0 : i32
    %4 = arith.cmpi ne, %3, %c0_i32_1 : i32
    %c0_i32_2 = arith.constant 0 : i32
    %5 = arith.cmpi slt, %3, %c0_i32_2 : i32
    %c0_i32_3 = arith.constant 0 : i32
    %6 = arith.cmpi slt, %2, %c0_i32_3 : i32
    %7 = arith.xori %5, %6 : i1
    %8 = arith.andi %7, %4 : i1
    %9 = arith.addi %3, %2 : i32
    %10 = arith.select %8, %9, %3 : i32
    %c2_i32_4 = arith.constant 2 : i32
    %11 = arith.muli %c2_i32_4, %10 : i32
    %12 = arith.subi %0, %11 : i32
    %c0_i32_5 = arith.constant 0 : i32
    %c0_i32_6 = arith.constant 0 : i32
    %c0_i32_7 = arith.constant 0 : i32
    return %12, %c0_i32_5, %c0_i32_6 : i32, i32, i32
  }
  func.func @transform_5(%arg0: i32, %arg1: i32) -> (i32, i32, i32) {
    %c0_i32 = arith.constant 0 : i32
    %c0_i32_0 = arith.constant 0 : i32
    %c0_i32_1 = arith.constant 0 : i32
    return %arg1, %c0_i32, %c0_i32_0 : i32, i32, i32
  }
  func.func @transform_6(%arg0: i32, %arg1: i32) -> (i32, i32, i32) {
    %c0_i32 = arith.constant 0 : i32
    %c0_i32_0 = arith.constant 0 : i32
    %c0_i32_1 = arith.constant 0 : i32
    return %arg1, %c0_i32, %c0_i32_0 : i32, i32, i32
  }
  func.func @transform_7(%arg0: i32, %arg1: i32) -> (i32, i32, i32) {
    %c0_i32 = arith.constant 0 : i32
    %c0_i32_0 = arith.constant 0 : i32
    %c0_i32_1 = arith.constant 0 : i32
    return %arg1, %c0_i32, %c0_i32_0 : i32, i32, i32
  }
  func.func @transform_8(%arg0: i32, %arg1: i32) -> (i32, i32, i32) {
    %c0_i32 = arith.constant 0 : i32
    %c0_i32_0 = arith.constant 0 : i32
    %c0_i32_1 = arith.constant 0 : i32
    return %arg1, %c0_i32, %c0_i32_0 : i32, i32, i32
  }
  func.func @transform_9(%arg0: i32, %arg1: i32) -> (i32, i32, i32) {
    %c0_i32 = arith.constant 0 : i32
    %c0_i32_0 = arith.constant 0 : i32
    %c0_i32_1 = arith.constant 0 : i32
    return %arg1, %c0_i32, %c0_i32_0 : i32, i32, i32
  }
  func.func @transform_10(%arg0: i32, %arg1: i32) -> (i32, i32, i32) {
    %c0_i32 = arith.constant 0 : i32
    %c0_i32_0 = arith.constant 0 : i32
    %c0_i32_1 = arith.constant 0 : i32
    return %arg1, %c0_i32, %c0_i32_0 : i32, i32, i32
  }
  func.func @transform_11(%arg0: i32, %arg1: i32) -> (i32, i32, i32) {
    %c0_i32 = arith.constant 0 : i32
    %c0_i32_0 = arith.constant 0 : i32
    %c0_i32_1 = arith.constant 0 : i32
    return %arg1, %c0_i32, %c0_i32_0 : i32, i32, i32
  }
  func.func @transform_12(%arg0: i32, %arg1: i32) -> (i32, i32) {
    %c0_i32 = arith.constant 0 : i32
    %c0_i32_0 = arith.constant 0 : i32
    %c0_i32_1 = arith.constant 0 : i32
    return %c0_i32, %c0_i32_0 : i32, i32
  }
  func.func @transform_13(%arg0: i32, %arg1: i32) -> i32 {
    %c0_i32 = arith.constant 0 : i32
    %c0_i32_0 = arith.constant 0 : i32
    return %c0_i32 : i32
  }
  func.func @transform_14(%arg0: i32, %arg1: i32) -> (i32, i32, i32) {
    %c0_i32 = arith.constant 0 : i32
    %c0_i32_0 = arith.constant 0 : i32
    %c0_i32_1 = arith.constant 0 : i32
    return %arg0, %c0_i32, %c0_i32_0 : i32, i32, i32
  }
}

</mosaic_0001>

<llo_original>
// kernel: tpu_custom_call.1
$region0: #{tpu_custom_call.1}
  #allocation0 [shape = 'u32[]', space=smem, size = 0x4, offset = 0x4, fixed_abs, tag = 'smem constant byte address 0x4 - core index']
  #allocation1 [shape = 'u32[72,128]{1,0:T(1,128)}', space=vmem, size = 0x9000, scoped, tag = 'internal scratch']
  #allocation2 [shape = 'f32[8,32]{1,0:T(8,128)}', space=vmem, size = 0x1000, scoped, tag = 'scratch operand']
  #allocation3 [shape = 's32[1]{0:T(128)S(6)}', space=smem, size = 0x200, scoped, tag = 'scoped memory for tpu_custom_call.1']
  %s0 = inlined_call_operand.vmem [shape: f32[2,8,32], index: 0, kind: input, shape index: {}]
  %s1 = inlined_call_operand.vmem [shape: f32[2,8,32], index: 1, kind: input, shape index: {}]
  %s2 = inlined_call_operand.vmem [shape: f32[2,8,32], index: 2, kind: input, shape index: {}]
  %s3 = inlined_call_operand.vmem [shape: f32[2,8,32], index: 3, kind: input, shape index: {}]
  %s4 = inlined_call_operand.vmem [shape: f32[2,8,32], index: 4, kind: input, shape index: {}]
  %s5 = inlined_call_operand.vmem [shape: f32[4,32,8], index: 5, kind: input, shape index: {}]
  %s6 = inlined_call_operand.vmem [shape: f32[4,1,8], index: 6, kind: input, shape index: {}]
  %s7 = inlined_call_operand.vmem [shape: f32[4,32,8], index: 7, kind: input, shape index: {}]
  %s8 = inlined_call_operand.vmem [shape: f32[4,1,8], index: 8, kind: input, shape index: {}]
  %s9 = inlined_call_operand.vmem [shape: f32[4,32,8], index: 9, kind: input, shape index: {}]
  %s10 = inlined_call_operand.vmem [shape: f32[4,1,8], index: 10, kind: input, shape index: {}]
  %s11 = inlined_call_operand.vmem [shape: f32[4,8,32], index: 11, kind: input, shape index: {}]
  %s12 = inlined_call_operand.vmem [shape: f32[1,32], index: 12, kind: input, shape index: {}]
  %s13 = inlined_call_operand.<no memory space> [shape: s32[1], index: 13, kind: input, shape index: {}]
  %s14 = inlined_call_operand.hbm [shape: f32[2,8,32], index: 14, kind: output, shape index: {}]
  %s15 = sld [smem:[#allocation0]]
  $region97: #{tpu_custom_call.1} parent=0
    _
  %s17 = ssub.s32 1, %s15
  %s18 = scalar_select 0, %s17, %s15
  %19 = sst [smem:[#allocation3]] %s13
  $region1: #{tpu_custom_call.1} parent=0
    #allocation4 [shape = 'u8[8192]{0}', space=vmem, size = 0x2000, scoped, tag = 'output window, operand 0']
    #allocation5 [shape = 's32[2]{0}', space=sflag, size = 0x8, scoped, tag = 'scoped memory for tpu_custom_call.1']
    %20 = vsyncpa [#allocation5], 0
    %s21 = scalar_lea.sflag [#allocation5], 1
    %22 = vsyncpa %s21, 0
    loop: start=0, step=1, limit=10
    $region2: #{tpu_custom_call.1} parent=1 // loop_pre_header
      _
    $region3: #{tpu_custom_call.1} parent=1 // loop_header
      %s24 = sphi 0, %s28
      %p25 = scmp.ge.s32.totalorder %s24, 10
      %s31 = sphi 0, %s43
      %s32 = sphi 0, %s39
      %s33 = sphi 0, %s31
      %s34 = sphi 0, %s32
      %s35 = sphi 0, %s33
      %s36 = sphi 0, %s34
      %s46 = sphi 0, %s48
      %s49 = sphi 0, %s46
      %s50 = sphi 0, %s49
      %s66 = sphi 0, %s50
      %s72 = sphi 0, %s74
      %s75 = sphi 0, %s72
      %s76 = sphi 0, %s75
      %s92 = sphi 0, %s76
      %s98 = sphi 0, %s100
      %s101 = sphi 0, %s98
      %s102 = sphi 0, %s101
      %s118 = sphi 0, %s102
      %s154 = sphi 0, %s156
      %s157 = sphi 0, %s154
      %s158 = sphi 0, %s157
      %s174 = sphi 0, %s158
      %s210 = sphi 0, %s212
      %s213 = sphi 0, %s210
      %s214 = sphi 0, %s213
      %s230 = sphi 0, %s214
      %s236 = sphi 0, %s238
      %s239 = sphi 0, %s236
      %s240 = sphi 0, %s239
      %s256 = sphi 0, %s240
      %s262 = sphi 0, %s264
      %s265 = sphi 0, %s262
      %s266 = sphi 0, %s265
      %s282 = sphi 0, %s266
      %s288 = sphi 0, %s290
      %s291 = sphi 0, %s288
      %s292 = sphi 0, %s291
      %s308 = sphi 0, %s292
      %s314 = sphi 0, %s316
      %s317 = sphi 0, %s314
      %s318 = sphi 0, %s317
      %s334 = sphi 0, %s318
      %s340 = sphi 0, %s342
      %s343 = sphi 0, %s340
      %s344 = sphi 0, %s343
      %s360 = sphi 0, %s344
      %s366 = sphi 0, %s368
      %s369 = sphi 0, %s366
      %s370 = sphi 0, %s369
      %s386 = sphi 0, %s370
      %s392 = sphi 0, %s394
      %s395 = sphi 0, %s392
      %s396 = sphi 0, %s395
      %s412 = sphi 0, %s396
      %s416 = sphi 0, %s416
      %s418 = sphi 0, %s416
      %s419 = sphi 0, %s418
      %s433 = sphi 0, %s419
      %s437 = sphi 0, %s437
      %s439 = sphi 0, %s437
      %s440 = sphi 0, %s439
      %s454 = sphi 0, %s440
      %s460 = sphi 0, %s462
      %s463 = sphi 0, %s460
      %s464 = sphi 0, %s463
      %s480 = sphi 0, %s464
    $region4: #{tpu_custom_call.1} parent=1 // loop_header_branch
      %27 = sbr.rel (%p25) target = $region8
    $region5: #{tpu_custom_call.1} parent=1 // loop_body
      %s29 = ssub.s32 %s24, 1
      %s30 = ssub.s32 %s24, 2
      %s37 = sadd.s32 1, %s32
      %p38 = scmp.ge.s32.totalorder %s37, 4
      %s39 = scalar_select %p38, 0, %s37
      %s40 = sadd.s32 1, %s31
      %s41 = scalar_select %p38, %s40, %s31
      %p42 = scmp.ge.s32.totalorder %s41, 2
      %s43 = scalar_select %p42, 0, %s41
      %s44 = ssub.s32 %s31, %s43
      %p45 = scmp.eq.s32.totalorder %s44, 0
      %s47 = sadd.s32 %s46, 1
      %s48 = scalar_select %p45, %s46, %s47
      %p51 = pneg %p45
      %p52 = scmp.eq.s32.totalorder %s24, 7
      %p53 = por %p51, %p52
      %p54 = scmp.ne.s32.totalorder %s46, %s49
      %p55 = scmp.eq.s32.totalorder %s24, 0
      %p56 = por %p54, %p55
      %p57 = scmp.ne.s32.totalorder %s46, %s49
      %p58 = scmp.eq.s32.totalorder %s29, 7
      %p59 = por %p57, %p58
      %p60 = scmp.ne.s32.totalorder %s49, %s50
      %p61 = scmp.eq.s32.totalorder %s29, 0
      %p62 = por %p60, %p61
      %p63 = scmp.ne.s32.totalorder %s49, %s50
      %p64 = scmp.eq.s32.totalorder %s30, 7
      %p65 = por %p63, %p64
      %p67 = scmp.ne.s32.totalorder %s50, %s66
      %p68 = scmp.eq.s32.totalorder %s30, 0
      %p69 = por %p67, %p68
      %s70 = ssub.s32 %s31, %s43
      %p71 = scmp.eq.s32.totalorder %s70, 0
      %s73 = sadd.s32 %s72, 1
      %s74 = scalar_select %p71, %s72, %s73
      %p77 = pneg %p71
      %p78 = scmp.eq.s32.totalorder %s24, 7
      %p79 = por %p77, %p78
      %p80 = scmp.ne.s32.totalorder %s72, %s75
      %p81 = scmp.eq.s32.totalorder %s24, 0
      %p82 = por %p80, %p81
      %p83 = scmp.ne.s32.totalorder %s72, %s75
      %p84 = scmp.eq.s32.totalorder %s29, 7
      %p85 = por %p83, %p84
      %p86 = scmp.ne.s32.totalorder %s75, %s76
      %p87 = scmp.eq.s32.totalorder %s29, 0
      %p88 = por %p86, %p87
      %p89 = scmp.ne.s32.totalorder %s75, %s76
      %p90 = scmp.eq.s32.totalorder %s30, 7
      %p91 = por %p89, %p90
      %p93 = scmp.ne.s32.totalorder %s76, %s92
      %p94 = scmp.eq.s32.totalorder %s30, 0
      %p95 = por %p93, %p94
      %s96 = ssub.s32 %s31, %s43
      %p97 = scmp.eq.s32.totalorder %s96, 0
      %s99 = sadd.s32 %s98, 1
      %s100 = scalar_select %p97, %s98, %s99
      %p103 = pneg %p97
      %p104 = scmp.eq.s32.totalorder %s24, 7
      %p105 = por %p103, %p104
      %p106 = scmp.ne.s32.totalorder %s98, %s101
      %p107 = scmp.eq.s32.totalorder %s24, 0
      %p108 = por %p106, %p107
      %p109 = scmp.ne.s32.totalorder %s98, %s101
      %p110 = scmp.eq.s32.totalorder %s29, 7
      %p111 = por %p109, %p110
      %p112 = scmp.ne.s32.totalorder %s101, %s102
      %p113 = scmp.eq.s32.totalorder %s29, 0
      %p114 = por %p112, %p113
      %p115 = scmp.ne.s32.totalorder %s101, %s102
      %p116 = scmp.eq.s32.totalorder %s30, 7
      %p117 = por %p115, %p116
      %p119 = scmp.ne.s32.totalorder %s102, %s118
      %p120 = scmp.eq.s32.totalorder %s30, 0
      %p121 = por %p119, %p120
      %s122 = sadd.s32 %s31, 1
      %p123 = scmp.lt.s32.totalorder %s31, 0
      %s124 = ssub.s32 0, %s31
      %s125 = scalar_select %p123, %s124, %s31
      %s126 = sand.u32 %s125, 1
      %s127 = ssub.s32 0, %s126
      %s128 = scalar_select %p123, %s127, %s126
      %p129 = scmp.ne.s32.totalorder %s128, 0
      %p130 = scmp.lt.s32.totalorder %s128, 0
      %p131 = pnand %p130, %p129
      %p132 = pneg %p131
      %s133 = sadd.s32 %s128, 2
      %s134 = scalar_select %p132, %s133, %s128
      %s135 = smul.u32 %s134, 2
      %s136 = ssub.s32 %s122, %s135
      %s137 = sadd.s32 %s43, 1
      %p138 = scmp.lt.s32.totalorder %s43, 0
      %s139 = ssub.s32 0, %s43
      %s140 = scalar_select %p138, %s139, %s43
      %s141 = sand.u32 %s140, 1
      %s142 = ssub.s32 0, %s141
      %s143 = scalar_select %p138, %s142, %s141
      %p144 = scmp.ne.s32.totalorder %s143, 0
      %p145 = scmp.lt.s32.totalorder %s143, 0
      %p146 = pnand %p145, %p144
      %p147 = pneg %p146
      %s148 = sadd.s32 %s143, 2
      %s149 = scalar_select %p147, %s148, %s143
      %s150 = smul.u32 %s149, 2
      %s151 = ssub.s32 %s137, %s150
      %s152 = ssub.s32 %s136, %s151
      %p153 = scmp.eq.s32.totalorder %s152, 0
      %s155 = sadd.s32 %s154, 1
      %s156 = scalar_select %p153, %s154, %s155
      %p159 = pneg %p153
      %p160 = scmp.eq.s32.totalorder %s24, 7
      %p161 = por %p159, %p160
      %p162 = scmp.ne.s32.totalorder %s154, %s157
      %p163 = scmp.eq.s32.totalorder %s24, 0
      %p164 = por %p162, %p163
      %p165 = scmp.ne.s32.totalorder %s154, %s157
      %p166 = scmp.eq.s32.totalorder %s29, 7
      %p167 = por %p165, %p166
      %p168 = scmp.ne.s32.totalorder %s157, %s158
      %p169 = scmp.eq.s32.totalorder %s29, 0
      %p170 = por %p168, %p169
      %p171 = scmp.ne.s32.totalorder %s157, %s158
      %p172 = scmp.eq.s32.totalorder %s30, 7
      %p173 = por %p171, %p172
      %p175 = scmp.ne.s32.totalorder %s158, %s174
      %p176 = scmp.eq.s32.totalorder %s30, 0
      %p177 = por %p175, %p176
      %s178 = sadd.s32 %s31, 1
      %p179 = scmp.lt.s32.totalorder %s31, 0
      %s180 = ssub.s32 0, %s31
      %s181 = scalar_select %p179, %s180, %s31
      %s182 = sand.u32 %s181, 1
      %s183 = ssub.s32 0, %s182
      %s184 = scalar_select %p179, %s183, %s182
      %p185 = scmp.ne.s32.totalorder %s184, 0
      %p186 = scmp.lt.s32.totalorder %s184, 0
      %p187 = pnand %p186, %p185
      %p188 = pneg %p187
      %s189 = sadd.s32 %s184, 2
      %s190 = scalar_select %p188, %s189, %s184
      %s191 = smul.u32 %s190, 2
      %s192 = ssub.s32 %s178, %s191
      %s193 = sadd.s32 %s43, 1
      %p194 = scmp.lt.s32.totalorder %s43, 0
      %s195 = ssub.s32 0, %s43
      %s196 = scalar_select %p194, %s195, %s43
      %s197 = sand.u32 %s196, 1
      %s198 = ssub.s32 0, %s197
      %s199 = scalar_select %p194, %s198, %s197
      %p200 = scmp.ne.s32.totalorder %s199, 0
      %p201 = scmp.lt.s32.totalorder %s199, 0
      %p202 = pnand %p201, %p200
      %p203 = pneg %p202
      %s204 = sadd.s32 %s199, 2
      %s205 = scalar_select %p203, %s204, %s199
      %s206 = smul.u32 %s205, 2
      %s207 = ssub.s32 %s193, %s206
      %s208 = ssub.s32 %s192, %s207
      %p209 = scmp.eq.s32.totalorder %s208, 0
      %s211 = sadd.s32 %s210, 1
      %s212 = scalar_select %p209, %s210, %s211
      %p215 = pneg %p209
      %p216 = scmp.eq.s32.totalorder %s24, 7
      %p217 = por %p215, %p216
      %p218 = scmp.ne.s32.totalorder %s210, %s213
      %p219 = scmp.eq.s32.totalorder %s24, 0
      %p220 = por %p218, %p219
      %p221 = scmp.ne.s32.totalorder %s210, %s213
      %p222 = scmp.eq.s32.totalorder %s29, 7
      %p223 = por %p221, %p222
      %p224 = scmp.ne.s32.totalorder %s213, %s214
      %p225 = scmp.eq.s32.totalorder %s29, 0
      %p226 = por %p224, %p225
      %p227 = scmp.ne.s32.totalorder %s213, %s214
      %p228 = scmp.eq.s32.totalorder %s30, 7
      %p229 = por %p227, %p228
      %p231 = scmp.ne.s32.totalorder %s214, %s230
      %p232 = scmp.eq.s32.totalorder %s30, 0
      %p233 = por %p231, %p232
      %s234 = ssub.s32 %s32, %s39
      %p235 = scmp.eq.s32.totalorder %s234, 0
      %s237 = sadd.s32 %s236, 1
      %s238 = scalar_select %p235, %s236, %s237
      %p241 = pneg %p235
      %p242 = scmp.eq.s32.totalorder %s24, 7
      %p243 = por %p241, %p242
      %p244 = scmp.ne.s32.totalorder %s236, %s239
      %p245 = scmp.eq.s32.totalorder %s24, 0
      %p246 = por %p244, %p245
      %p247 = scmp.ne.s32.totalorder %s236, %s239
      %p248 = scmp.eq.s32.totalorder %s29, 7
      %p249 = por %p247, %p248
      %p250 = scmp.ne.s32.totalorder %s239, %s240
      %p251 = scmp.eq.s32.totalorder %s29, 0
      %p252 = por %p250, %p251
      %p253 = scmp.ne.s32.totalorder %s239, %s240
      %p254 = scmp.eq.s32.totalorder %s30, 7
      %p255 = por %p253, %p254
      %p257 = scmp.ne.s32.totalorder %s240, %s256
      %p258 = scmp.eq.s32.totalorder %s30, 0
      %p259 = por %p257, %p258
      %s260 = ssub.s32 %s32, %s39
      %p261 = scmp.eq.s32.totalorder %s260, 0
      %s263 = sadd.s32 %s262, 1
      %s264 = scalar_select %p261, %s262, %s263
      %p267 = pneg %p261
      %p268 = scmp.eq.s32.totalorder %s24, 7
      %p269 = por %p267, %p268
      %p270 = scmp.ne.s32.totalorder %s262, %s265
      %p271 = scmp.eq.s32.totalorder %s24, 0
      %p272 = por %p270, %p271
      %p273 = scmp.ne.s32.totalorder %s262, %s265
      %p274 = scmp.eq.s32.totalorder %s29, 7
      %p275 = por %p273, %p274
      %p276 = scmp.ne.s32.totalorder %s265, %s266
      %p277 = scmp.eq.s32.totalorder %s29, 0
      %p278 = por %p276, %p277
      %p279 = scmp.ne.s32.totalorder %s265, %s266
      %p280 = scmp.eq.s32.totalorder %s30, 7
      %p281 = por %p279, %p280
      %p283 = scmp.ne.s32.totalorder %s266, %s282
      %p284 = scmp.eq.s32.totalorder %s30, 0
      %p285 = por %p283, %p284
      %s286 = ssub.s32 %s32, %s39
      %p287 = scmp.eq.s32.totalorder %s286, 0
      %s289 = sadd.s32 %s288, 1
      %s290 = scalar_select %p287, %s288, %s289
      %p293 = pneg %p287
      %p294 = scmp.eq.s32.totalorder %s24, 7
      %p295 = por %p293, %p294
      %p296 = scmp.ne.s32.totalorder %s288, %s291
      %p297 = scmp.eq.s32.totalorder %s24, 0
      %p298 = por %p296, %p297
      %p299 = scmp.ne.s32.totalorder %s288, %s291
      %p300 = scmp.eq.s32.totalorder %s29, 7
      %p301 = por %p299, %p300
      %p302 = scmp.ne.s32.totalorder %s291, %s292
      %p303 = scmp.eq.s32.totalorder %s29, 0
      %p304 = por %p302, %p303
      %p305 = scmp.ne.s32.totalorder %s291, %s292
      %p306 = scmp.eq.s32.totalorder %s30, 7
      %p307 = por %p305, %p306
      %p309 = scmp.ne.s32.totalorder %s292, %s308
      %p310 = scmp.eq.s32.totalorder %s30, 0
      %p311 = por %p309, %p310
      %s312 = ssub.s32 %s32, %s39
      %p313 = scmp.eq.s32.totalorder %s312, 0
      %s315 = sadd.s32 %s314, 1
      %s316 = scalar_select %p313, %s314, %s315
      %p319 = pneg %p313
      %p320 = scmp.eq.s32.totalorder %s24, 7
      %p321 = por %p319, %p320
      %p322 = scmp.ne.s32.totalorder %s314, %s317
      %p323 = scmp.eq.s32.totalorder %s24, 0
      %p324 = por %p322, %p323
      %p325 = scmp.ne.s32.totalorder %s314, %s317
      %p326 = scmp.eq.s32.totalorder %s29, 7
      %p327 = por %p325, %p326
      %p328 = scmp.ne.s32.totalorder %s317, %s318
      %p329 = scmp.eq.s32.totalorder %s29, 0
      %p330 = por %p328, %p329
      %p331 = scmp.ne.s32.totalorder %s317, %s318
      %p332 = scmp.eq.s32.totalorder %s30, 7
      %p333 = por %p331, %p332
      %p335 = scmp.ne.s32.totalorder %s318, %s334
      %p336 = scmp.eq.s32.totalorder %s30, 0
      %p337 = por %p335, %p336
      %s338 = ssub.s32 %s32, %s39
      %p339 = scmp.eq.s32.totalorder %s338, 0
      %s341 = sadd.s32 %s340, 1
      %s342 = scalar_select %p339, %s340, %s341
      %p345 = pneg %p339
      %p346 = scmp.eq.s32.totalorder %s24, 7
      %p347 = por %p345, %p346
      %p348 = scmp.ne.s32.totalorder %s340, %s343
      %p349 = scmp.eq.s32.totalorder %s24, 0
      %p350 = por %p348, %p349
      %p351 = scmp.ne.s32.totalorder %s340, %s343
      %p352 = scmp.eq.s32.totalorder %s29, 7
      %p353 = por %p351, %p352
      %p354 = scmp.ne.s32.totalorder %s343, %s344
      %p355 = scmp.eq.s32.totalorder %s29, 0
      %p356 = por %p354, %p355
      %p357 = scmp.ne.s32.totalorder %s343, %s344
      %p358 = scmp.eq.s32.totalorder %s30, 7
      %p359 = por %p357, %p358
      %p361 = scmp.ne.s32.totalorder %s344, %s360
      %p362 = scmp.eq.s32.totalorder %s30, 0
      %p363 = por %p361, %p362
      %s364 = ssub.s32 %s32, %s39
      %p365 = scmp.eq.s32.totalorder %s364, 0
      %s367 = sadd.s32 %s366, 1
      %s368 = scalar_select %p365, %s366, %s367
      %p371 = pneg %p365
      %p372 = scmp.eq.s32.totalorder %s24, 7
      %p373 = por %p371, %p372
      %p374 = scmp.ne.s32.totalorder %s366, %s369
      %p375 = scmp.eq.s32.totalorder %s24, 0
      %p376 = por %p374, %p375
      %p377 = scmp.ne.s32.totalorder %s366, %s369
      %p378 = scmp.eq.s32.totalorder %s29, 7
      %p379 = por %p377, %p378
      %p380 = scmp.ne.s32.totalorder %s369, %s370
      %p381 = scmp.eq.s32.totalorder %s29, 0
      %p382 = por %p380, %p381
      %p383 = scmp.ne.s32.totalorder %s369, %s370
      %p384 = scmp.eq.s32.totalorder %s30, 7
      %p385 = por %p383, %p384
      %p387 = scmp.ne.s32.totalorder %s370, %s386
      %p388 = scmp.eq.s32.totalorder %s30, 0
      %p389 = por %p387, %p388
      %s390 = ssub.s32 %s32, %s39
      %p391 = scmp.eq.s32.totalorder %s390, 0
      %s393 = sadd.s32 %s392, 1
      %s394 = scalar_select %p391, %s392, %s393
      %p397 = pneg %p391
      %p398 = scmp.eq.s32.totalorder %s24, 7
      %p399 = por %p397, %p398
      %p400 = scmp.ne.s32.totalorder %s392, %s395
      %p401 = scmp.eq.s32.totalorder %s24, 0
      %p402 = por %p400, %p401
      %p403 = scmp.ne.s32.totalorder %s392, %s395
      %p404 = scmp.eq.s32.totalorder %s29, 7
      %p405 = por %p403, %p404
      %p406 = scmp.ne.s32.totalorder %s395, %s396
      %p407 = scmp.eq.s32.totalorder %s29, 0
      %p408 = por %p406, %p407
      %p409 = scmp.ne.s32.totalorder %s395, %s396
      %p410 = scmp.eq.s32.totalorder %s30, 7
      %p411 = por %p409, %p410
      %p413 = scmp.ne.s32.totalorder %s396, %s412
      %p414 = scmp.eq.s32.totalorder %s30, 0
      %p415 = por %p413, %p414
      %s417 = sadd.s32 %s416, 1
      %p420 = scmp.eq.s32.totalorder %s24, 7
      %p421 = scmp.ne.s32.totalorder %s416, %s418
      %p422 = scmp.eq.s32.totalorder %s24, 0
      %p423 = por %p421, %p422
      %p424 = scmp.ne.s32.totalorder %s416, %s418
      %p425 = scmp.eq.s32.totalorder %s29, 7
      %p426 = por %p424, %p425
      %p427 = scmp.ne.s32.totalorder %s418, %s419
      %p428 = scmp.eq.s32.totalorder %s29, 0
      %p429 = por %p427, %p428
      %p430 = scmp.ne.s32.totalorder %s418, %s419
      %p431 = scmp.eq.s32.totalorder %s30, 7
      %p432 = por %p430, %p431
      %p434 = scmp.ne.s32.totalorder %s419, %s433
      %p435 = scmp.eq.s32.totalorder %s30, 0
      %p436 = por %p434, %p435
      %s438 = sadd.s32 %s437, 1
      %p441 = scmp.eq.s32.totalorder %s24, 7
      %p442 = scmp.ne.s32.totalorder %s437, %s439
      %p443 = scmp.eq.s32.totalorder %s24, 0
      %p444 = por %p442, %p443
      %p445 = scmp.ne.s32.totalorder %s437, %s439
      %p446 = scmp.eq.s32.totalorder %s29, 7
      %p447 = por %p445, %p446
      %p448 = scmp.ne.s32.totalorder %s439, %s440
      %p449 = scmp.eq.s32.totalorder %s29, 0
      %p450 = por %p448, %p449
      %p451 = scmp.ne.s32.totalorder %s439, %s440
      %p452 = scmp.eq.s32.totalorder %s30, 7
      %p453 = por %p451, %p452
      %p455 = scmp.ne.s32.totalorder %s440, %s454
      %p456 = scmp.eq.s32.totalorder %s30, 0
      %p457 = por %p455, %p456
      %s458 = ssub.s32 %s31, %s43
      %p459 = scmp.eq.s32.totalorder %s458, 0
      %s461 = sadd.s32 %s460, 1
      %s462 = scalar_select %p459, %s460, %s461
      %p465 = pneg %p459
      %p466 = scmp.eq.s32.totalorder %s24, 7
      %p467 = por %p465, %p466
      %p468 = scmp.ne.s32.totalorder %s460, %s463
      %p469 = scmp.eq.s32.totalorder %s24, 0
      %p470 = por %p468, %p469
      %p471 = scmp.ne.s32.totalorder %s460, %s463
      %p472 = scmp.eq.s32.totalorder %s29, 7
      %p473 = por %p471, %p472
      %p474 = scmp.ne.s32.totalorder %s463, %s464
      %p475 = scmp.eq.s32.totalorder %s29, 0
      %p476 = por %p474, %p475
      %p477 = scmp.ne.s32.totalorder %s463, %s464
      %p478 = scmp.eq.s32.totalorder %s30, 7
      %p479 = por %p477, %p478
      %p481 = scmp.ne.s32.totalorder %s464, %s480
      %p482 = scmp.eq.s32.totalorder %s30, 0
      %p483 = por %p481, %p482
      %p484 = scmp.le.s32.totalorder 1, %s24
      %p485 = scmp.lt.s32.totalorder %s24, 9
      %p486 = pnand %p484, %p485
      %p487 = pneg %p486
      // Predicated region
      $region9: #{tpu_custom_call.1} parent=5 // pred_check
        _
      $region10: #{tpu_custom_call.1} parent=5 // pred_check_branch
        %489 = sbr.rel (%p486) target = $region12
      $region11: #{tpu_custom_call.1} parent=5 // pred_region
        %s490 = ssub.s32 %s24, 1
        // Predicated region
        $region13: #{tpu_custom_call.1} parent=11 // pred_check
          %p491 = pneg %p429
        $region14: #{tpu_custom_call.1} parent=11 // pred_check_branch
          %493 = sbr.rel (%p491) target = $region16
        $region15: #{tpu_custom_call.1} parent=11 // pred_region
          _
        $region16: #{tpu_custom_call.1} parent=11 // pred_fallthru
          _
        // Predicated region
        $region17: #{tpu_custom_call.1} parent=11 // pred_check
          %p494 = pneg %p450
        $region18: #{tpu_custom_call.1} parent=11 // pred_check_branch
          %496 = sbr.rel (%p494) target = $region20
        $region19: #{tpu_custom_call.1} parent=11 // pred_region
          _
        $region20: #{tpu_custom_call.1} parent=11 // pred_fallthru
          _
      $region12: #{tpu_custom_call.1} parent=5 // pred_fallthru
        _
      %p497 = scmp.lt.s32.totalorder %s24, 8
      // Predicated region
      $region21: #{tpu_custom_call.1} parent=5 // pred_check
        %p498 = pneg %p497
      $region22: #{tpu_custom_call.1} parent=5 // pred_check_branch
        %500 = sbr.rel (%p498) target = $region24
      $region23: #{tpu_custom_call.1} parent=5 // pred_region
        // Predicated region
        $region25: #{tpu_custom_call.1} parent=23 // pred_check
          %p501 = pneg %p56
        $region26: #{tpu_custom_call.1} parent=23 // pred_check_branch
          %503 = sbr.rel (%p501) target = $region28
        $region27: #{tpu_custom_call.1} parent=23 // pred_region
          %p504 = scmp.lt.s32.totalorder %s31, 1
          %s505 = scalar_select %p504, %s31, 1
          %s506 = smul.addr %s505, 8
          %s507 = scalar_lea.vmem %s0, %s506
        $region28: #{tpu_custom_call.1} parent=23 // pred_fallthru
          _
        // Predicated region
        $region29: #{tpu_custom_call.1} parent=23 // pred_check
          %p508 = pneg %p82
        $region30: #{tpu_custom_call.1} parent=23 // pred_check_branch
          %510 = sbr.rel (%p508) target = $region32
        $region31: #{tpu_custom_call.1} parent=23 // pred_region
          %p511 = scmp.lt.s32.totalorder %s31, 1
          %s512 = scalar_select %p511, %s31, 1
          %s513 = smul.addr %s512, 8
          %s514 = scalar_lea.vmem %s1, %s513
        $region32: #{tpu_custom_call.1} parent=23 // pred_fallthru
          _
        // Predicated region
        $region33: #{tpu_custom_call.1} parent=23 // pred_check
          %p515 = pneg %p108
        $region34: #{tpu_custom_call.1} parent=23 // pred_check_branch
          %517 = sbr.rel (%p515) target = $region36
        $region35: #{tpu_custom_call.1} parent=23 // pred_region
          %p518 = scmp.lt.s32.totalorder %s31, 1
          %s519 = scalar_select %p518, %s31, 1
          %s520 = smul.addr %s519, 8
          %s521 = scalar_lea.vmem %s2, %s520
        $region36: #{tpu_custom_call.1} parent=23 // pred_fallthru
          _
        // Predicated region
        $region37: #{tpu_custom_call.1} parent=23 // pred_check
          %p522 = pneg %p164
        $region38: #{tpu_custom_call.1} parent=23 // pred_check_branch
          %524 = sbr.rel (%p522) target = $region40
        $region39: #{tpu_custom_call.1} parent=23 // pred_region
          %s525 = sadd.s32 %s31, 1
          %p526 = scmp.lt.s32.totalorder %s31, 0
          %s527 = ssub.s32 0, %s31
          %s528 = scalar_select %p526, %s527, %s31
          %s529 = sand.u32 %s528, 1
          %s530 = ssub.s32 0, %s529
          %s531 = scalar_select %p526, %s530, %s529
          %p532 = scmp.ne.s32.totalorder %s531, 0
          %p533 = scmp.lt.s32.totalorder %s531, 0
          %p534 = pnand %p533, %p532
          %p535 = pneg %p534
          %s536 = sadd.s32 %s531, 2
          %s537 = scalar_select %p535, %s536, %s531
          %s538 = smul.u32 %s537, 2
          %s539 = ssub.s32 %s525, %s538
          %p540 = scmp.lt.s32.totalorder %s539, 1
          %s541 = scalar_select %p540, %s539, 1
          %s542 = smul.addr %s541, 8
          %s543 = scalar_lea.vmem %s3, %s542
          %s544 = sadd.s32 %s31, 1
          %p545 = scmp.lt.s32.totalorder %s31, 0
          %s546 = ssub.s32 0, %s31
          %s547 = scalar_select %p545, %s546, %s31
          %s548 = sand.u32 %s547, 1
          %s549 = ssub.s32 0, %s548
          %s550 = scalar_select %p545, %s549, %s548
          %p551 = scmp.ne.s32.totalorder %s550, 0
          %p552 = scmp.lt.s32.totalorder %s550, 0
          %p553 = pnand %p552, %p551
          %p554 = pneg %p553
          %s555 = sadd.s32 %s550, 2
          %s556 = scalar_select %p554, %s555, %s550
          %s557 = smul.u32 %s556, 2
          %s558 = ssub.s32 %s544, %s557
        $region40: #{tpu_custom_call.1} parent=23 // pred_fallthru
          _
        // Predicated region
        $region41: #{tpu_custom_call.1} parent=23 // pred_check
          %p559 = pneg %p220
        $region42: #{tpu_custom_call.1} parent=23 // pred_check_branch
          %561 = sbr.rel (%p559) target = $region44
        $region43: #{tpu_custom_call.1} parent=23 // pred_region
          %s562 = sadd.s32 %s31, 1
          %p563 = scmp.lt.s32.totalorder %s31, 0
          %s564 = ssub.s32 0, %s31
          %s565 = scalar_select %p563, %s564, %s31
          %s566 = sand.u32 %s565, 1
          %s567 = ssub.s32 0, %s566
          %s568 = scalar_select %p563, %s567, %s566
          %p569 = scmp.ne.s32.totalorder %s568, 0
          %p570 = scmp.lt.s32.totalorder %s568, 0
          %p571 = pnand %p570, %p569
          %p572 = pneg %p571
          %s573 = sadd.s32 %s568, 2
          %s574 = scalar_select %p572, %s573, %s568
          %s575 = smul.u32 %s574, 2
          %s576 = ssub.s32 %s562, %s575
          %p577 = scmp.lt.s32.totalorder %s576, 1
          %s578 = scalar_select %p577, %s576, 1
          %s579 = smul.addr %s578, 8
          %s580 = scalar_lea.vmem %s4, %s579
          %s581 = sadd.s32 %s31, 1
          %p582 = scmp.lt.s32.totalorder %s31, 0
          %s583 = ssub.s32 0, %s31
          %s584 = scalar_select %p582, %s583, %s31
          %s585 = sand.u32 %s584, 1
          %s586 = ssub.s32 0, %s585
          %s587 = scalar_select %p582, %s586, %s585
          %p588 = scmp.ne.s32.totalorder %s587, 0
          %p589 = scmp.lt.s32.totalorder %s587, 0
          %p590 = pnand %p589, %p588
          %p591 = pneg %p590
          %s592 = sadd.s32 %s587, 2
          %s593 = scalar_select %p591, %s592, %s587
          %s594 = smul.u32 %s593, 2
          %s595 = ssub.s32 %s581, %s594
        $region44: #{tpu_custom_call.1} parent=23 // pred_fallthru
          _
        // Predicated region
        $region45: #{tpu_custom_call.1} parent=23 // pred_check
          %p596 = pneg %p246
        $region46: #{tpu_custom_call.1} parent=23 // pred_check_branch
          %598 = sbr.rel (%p596) target = $region48
        $region47: #{tpu_custom_call.1} parent=23 // pred_region
          %p599 = scmp.lt.s32.totalorder %s32, 3
          %s600 = scalar_select %p599, %s32, 3
          %s601 = smul.addr %s600, 4
          %s602 = smul.addr %s601, 8
          %s603 = scalar_lea.vmem %s5, %s602
        $region48: #{tpu_custom_call.1} parent=23 // pred_fallthru
          _
        // Predicated region
        $region49: #{tpu_custom_call.1} parent=23 // pred_check
          %p604 = pneg %p272
        $region50: #{tpu_custom_call.1} parent=23 // pred_check_branch
          %606 = sbr.rel (%p604) target = $region52
        $region51: #{tpu_custom_call.1} parent=23 // pred_region
          %p607 = scmp.lt.s32.totalorder %s32, 3
          %s608 = scalar_select %p607, %s32, 3
          %s609 = scalar_lea.vmem %s6, %s608
        $region52: #{tpu_custom_call.1} parent=23 // pred_fallthru
          _
        // Predicated region
        $region53: #{tpu_custom_call.1} parent=23 // pred_check
          %p610 = pneg %p298
        $region54: #{tpu_custom_call.1} parent=23 // pred_check_branch
          %612 = sbr.rel (%p610) target = $region56
        $region55: #{tpu_custom_call.1} parent=23 // pred_region
          %p613 = scmp.lt.s32.totalorder %s32, 3
          %s614 = scalar_select %p613, %s32, 3
          %s615 = smul.addr %s614, 4
          %s616 = smul.addr %s615, 8
          %s617 = scalar_lea.vmem %s7, %s616
        $region56: #{tpu_custom_call.1} parent=23 // pred_fallthru
          _
        // Predicated region
        $region57: #{tpu_custom_call.1} parent=23 // pred_check
          %p618 = pneg %p324
        $region58: #{tpu_custom_call.1} parent=23 // pred_check_branch
          %620 = sbr.rel (%p618) target = $region60
        $region59: #{tpu_custom_call.1} parent=23 // pred_region
          %p621 = scmp.lt.s32.totalorder %s32, 3
          %s622 = scalar_select %p621, %s32, 3
          %s623 = scalar_lea.vmem %s8, %s622
        $region60: #{tpu_custom_call.1} parent=23 // pred_fallthru
          _
        // Predicated region
        $region61: #{tpu_custom_call.1} parent=23 // pred_check
          %p624 = pneg %p350
        $region62: #{tpu_custom_call.1} parent=23 // pred_check_branch
          %626 = sbr.rel (%p624) target = $region64
        $region63: #{tpu_custom_call.1} parent=23 // pred_region
          %p627 = scmp.lt.s32.totalorder %s32, 3
          %s628 = scalar_select %p627, %s32, 3
          %s629 = smul.addr %s628, 4
          %s630 = smul.addr %s629, 8
          %s631 = scalar_lea.vmem %s9, %s630
        $region64: #{tpu_custom_call.1} parent=23 // pred_fallthru
          _
        // Predicated region
        $region65: #{tpu_custom_call.1} parent=23 // pred_check
          %p632 = pneg %p376
        $region66: #{tpu_custom_call.1} parent=23 // pred_check_branch
          %634 = sbr.rel (%p632) target = $region68
        $region67: #{tpu_custom_call.1} parent=23 // pred_region
          %p635 = scmp.lt.s32.totalorder %s32, 3
          %s636 = scalar_select %p635, %s32, 3
          %s637 = scalar_lea.vmem %s10, %s636
        $region68: #{tpu_custom_call.1} parent=23 // pred_fallthru
          _
        // Predicated region
        $region69: #{tpu_custom_call.1} parent=23 // pred_check
          %p638 = pneg %p402
        $region70: #{tpu_custom_call.1} parent=23 // pred_check_branch
          %640 = sbr.rel (%p638) target = $region72
        $region71: #{tpu_custom_call.1} parent=23 // pred_region
          %p641 = scmp.lt.s32.totalorder %s32, 3
          %s642 = scalar_select %p641, %s32, 3
          %s643 = smul.addr %s642, 8
          %s644 = scalar_lea.vmem %s11, %s643
        $region72: #{tpu_custom_call.1} parent=23 // pred_fallthru
          _
      $region24: #{tpu_custom_call.1} parent=5 // pred_fallthru
        _
      %p645 = scmp.le.s32.totalorder 1, %s24
      %p646 = scmp.lt.s32.totalorder %s24, 9
      %p647 = pnand %p645, %p646
      %p648 = pneg %p647
      // Predicated region
      $region73: #{tpu_custom_call.1} parent=5 // pred_check
        _
      $region74: #{tpu_custom_call.1} parent=5 // pred_check_branch
        %650 = sbr.rel (%p647) target = $region76
      $region75: #{tpu_custom_call.1} parent=5 // pred_region
        %s651 = ssub.s32 %s24, 1
        %p652 = scmp.lt.s32.totalorder %s33, 1
        %s653 = scalar_select %p652, %s33, 1
        %s654 = smul.addr %s653, 8
        %s655 = scalar_lea.vmem %s0, %s654
        %p656 = pneg %p62
        %p657 = pneg %p59
        %p658 = scmp.lt.s32.totalorder %s33, 1
        %s659 = scalar_select %p658, %s33, 1
        %s660 = smul.addr %s659, 8
        %s661 = scalar_lea.vmem %s1, %s660
        %p662 = pneg %p88
        %p663 = pneg %p85
        %p664 = scmp.lt.s32.totalorder %s33, 1
        %s665 = scalar_select %p664, %s33, 1
        %s666 = smul.addr %s665, 8
        %s667 = scalar_lea.vmem %s2, %s666
        %p668 = pneg %p114
        %p669 = pneg %p111
        %s670 = sadd.s32 %s33, 1
        %p671 = scmp.lt.s32.totalorder %s33, 0
        %s672 = ssub.s32 0, %s33
        %s673 = scalar_select %p671, %s672, %s33
        %s674 = sand.u32 %s673, 1
        %s675 = ssub.s32 0, %s674
        %s676 = scalar_select %p671, %s675, %s674
        %p677 = scmp.ne.s32.totalorder %s676, 0
        %p678 = scmp.lt.s32.totalorder %s676, 0
        %p679 = pnand %p678, %p677
        %p680 = pneg %p679
        %s681 = sadd.s32 %s676, 2
        %s682 = scalar_select %p680, %s681, %s676
        %s683 = smul.u32 %s682, 2
        %s684 = ssub.s32 %s670, %s683
        %p685 = scmp.lt.s32.totalorder %s684, 1
        %s686 = scalar_select %p685, %s684, 1
        %s687 = smul.addr %s686, 8
        %s688 = scalar_lea.vmem %s3, %s687
        %p689 = pneg %p170
        %p690 = pneg %p167
        %s691 = sadd.s32 %s33, 1
        %p692 = scmp.lt.s32.totalorder %s33, 0
        %s693 = ssub.s32 0, %s33
        %s694 = scalar_select %p692, %s693, %s33
        %s695 = sand.u32 %s694, 1
        %s696 = ssub.s32 0, %s695
        %s697 = scalar_select %p692, %s696, %s695
        %p698 = scmp.ne.s32.totalorder %s697, 0
        %p699 = scmp.lt.s32.totalorder %s697, 0
        %p700 = pnand %p699, %p698
        %p701 = pneg %p700
        %s702 = sadd.s32 %s697, 2
        %s703 = scalar_select %p701, %s702, %s697
        %s704 = smul.u32 %s703, 2
        %s705 = ssub.s32 %s691, %s704
        %p706 = scmp.lt.s32.totalorder %s705, 1
        %s707 = scalar_select %p706, %s705, 1
        %s708 = smul.addr %s707, 8
        %s709 = scalar_lea.vmem %s4, %s708
        %p710 = pneg %p226
        %p711 = pneg %p223
        %p712 = scmp.lt.s32.totalorder %s34, 3
        %s713 = scalar_select %p712, %s34, 3
        %s714 = smul.addr %s713, 4
        %s715 = smul.addr %s714, 8
        %s716 = scalar_lea.vmem %s5, %s715
        %p717 = pneg %p252
        %p718 = pneg %p249
        %p719 = scmp.lt.s32.totalorder %s34, 3
        %s720 = scalar_select %p719, %s34, 3
        %s721 = scalar_lea.vmem %s6, %s720
        %p722 = pneg %p278
        %p723 = pneg %p275
        %p724 = scmp.lt.s32.totalorder %s34, 3
        %s725 = scalar_select %p724, %s34, 3
        %s726 = smul.addr %s725, 4
        %s727 = smul.addr %s726, 8
        %s728 = scalar_lea.vmem %s7, %s727
        %p729 = pneg %p304
        %p730 = pneg %p301
        %p731 = scmp.lt.s32.totalorder %s34, 3
        %s732 = scalar_select %p731, %s34, 3
        %s733 = scalar_lea.vmem %s8, %s732
        %p734 = pneg %p330
        %p735 = pneg %p327
        %p736 = scmp.lt.s32.totalorder %s34, 3
        %s737 = scalar_select %p736, %s34, 3
        %s738 = smul.addr %s737, 4
        %s739 = smul.addr %s738, 8
        %s740 = scalar_lea.vmem %s9, %s739
        %p741 = pneg %p356
        %p742 = pneg %p353
        %p743 = scmp.lt.s32.totalorder %s34, 3
        %s744 = scalar_select %p743, %s34, 3
        %s745 = scalar_lea.vmem %s10, %s744
        %p746 = pneg %p382
        %p747 = pneg %p379
        %p748 = scmp.lt.s32.totalorder %s34, 3
        %s749 = scalar_select %p748, %s34, 3
        %s750 = smul.addr %s749, 8
        %s751 = scalar_lea.vmem %s11, %s750
        %p752 = pneg %p408
        %p753 = pneg %p405
        %p754 = pneg %p429
        %p755 = pneg %p426
        %p756 = pneg %p450
        %p757 = pneg %p447
        %p758 = pneg %p476
        %p759 = pneg %p473
        %s760 = sand.u32 %s463, 1
        %s761 = scalar_lea.sflag [#allocation5], %s760
        %s762 = sand.u32 %s463, 1
        %s763 = smul.addr %s762, 8
        %s764 = scalar_lea.vmem [#allocation4], %s763
        %p765 = scmp.lt.s32.totalorder %s33, 1
        %s766 = scalar_select %p765, %s33, 1
        %s767 = smul.addr %s766, 8
        %s768 = scalar_lea.vmem %s0, %s767
        %p769 = scmp.lt.s32.totalorder %s33, 1
        %s770 = scalar_select %p769, %s33, 1
        %s771 = smul.addr %s770, 8
        %s772 = scalar_lea.vmem %s1, %s771
        %p773 = scmp.lt.s32.totalorder %s33, 1
        %s774 = scalar_select %p773, %s33, 1
        %s775 = smul.addr %s774, 8
        %s776 = scalar_lea.vmem %s2, %s775
        %s777 = sadd.s32 %s33, 1
        %p778 = scmp.lt.s32.totalorder %s33, 0
        %s779 = ssub.s32 0, %s33
        %s780 = scalar_select %p778, %s779, %s33
        %s781 = sand.u32 %s780, 1
        %s782 = ssub.s32 0, %s781
        %s783 = scalar_select %p778, %s782, %s781
        %p784 = scmp.ne.s32.totalorder %s783, 0
        %p785 = scmp.lt.s32.totalorder %s783, 0
        %p786 = pnand %p785, %p784
        %p787 = pneg %p786
        %s788 = sadd.s32 %s783, 2
        %s789 = scalar_select %p787, %s788, %s783
        %s790 = smul.u32 %s789, 2
        %s791 = ssub.s32 %s777, %s790
        %p792 = scmp.lt.s32.totalorder %s791, 1
        %s793 = scalar_select %p792, %s791, 1
        %s794 = smul.addr %s793, 8
        %s795 = scalar_lea.vmem %s3, %s794
        %s796 = sadd.s32 %s33, 1
        %p797 = scmp.lt.s32.totalorder %s33, 0
        %s798 = ssub.s32 0, %s33
        %s799 = scalar_select %p797, %s798, %s33
        %s800 = sand.u32 %s799, 1
        %s801 = ssub.s32 0, %s800
        %s802 = scalar_select %p797, %s801, %s800
        %p803 = scmp.ne.s32.totalorder %s802, 0
        %p804 = scmp.lt.s32.totalorder %s802, 0
        %p805 = pnand %p804, %p803
        %p806 = pneg %p805
        %s807 = sadd.s32 %s802, 2
        %s808 = scalar_select %p806, %s807, %s802
        %s809 = smul.u32 %s808, 2
        %s810 = ssub.s32 %s796, %s809
        %s811 = sadd.s32 %s33, 1
        %p812 = scmp.lt.s32.totalorder %s33, 0
        %s813 = ssub.s32 0, %s33
        %s814 = scalar_select %p812, %s813, %s33
        %s815 = sand.u32 %s814, 1
        %s816 = ssub.s32 0, %s815
        %s817 = scalar_select %p812, %s816, %s815
        %p818 = scmp.ne.s32.totalorder %s817, 0
        %p819 = scmp.lt.s32.totalorder %s817, 0
        %p820 = pnand %p819, %p818
        %p821 = pneg %p820
        %s822 = sadd.s32 %s817, 2
        %s823 = scalar_select %p821, %s822, %s817
        %s824 = smul.u32 %s823, 2
        %s825 = ssub.s32 %s811, %s824
        %p826 = scmp.lt.s32.totalorder %s825, 1
        %s827 = scalar_select %p826, %s825, 1
        %s828 = smul.addr %s827, 8
        %s829 = scalar_lea.vmem %s4, %s828
        %s830 = sadd.s32 %s33, 1
        %p831 = scmp.lt.s32.totalorder %s33, 0
        %s832 = ssub.s32 0, %s33
        %s833 = scalar_select %p831, %s832, %s33
        %s834 = sand.u32 %s833, 1
        %s835 = ssub.s32 0, %s834
        %s836 = scalar_select %p831, %s835, %s834
        %p837 = scmp.ne.s32.totalorder %s836, 0
        %p838 = scmp.lt.s32.totalorder %s836, 0
        %p839 = pnand %p838, %p837
        %p840 = pneg %p839
        %s841 = sadd.s32 %s836, 2
        %s842 = scalar_select %p840, %s841, %s836
        %s843 = smul.u32 %s842, 2
        %s844 = ssub.s32 %s830, %s843
        %p845 = scmp.lt.s32.totalorder %s34, 3
        %s846 = scalar_select %p845, %s34, 3
        %s847 = smul.addr %s846, 4
        %s848 = smul.addr %s847, 8
        %s849 = scalar_lea.vmem %s5, %s848
        %p850 = scmp.lt.s32.totalorder %s34, 3
        %s851 = scalar_select %p850, %s34, 3
        %s852 = scalar_lea.vmem %s6, %s851
        %p853 = scmp.lt.s32.totalorder %s34, 3
        %s854 = scalar_select %p853, %s34, 3
        %s855 = smul.addr %s854, 4
        %s856 = smul.addr %s855, 8
        %s857 = scalar_lea.vmem %s7, %s856
        %p858 = scmp.lt.s32.totalorder %s34, 3
        %s859 = scalar_select %p858, %s34, 3
        %s860 = scalar_lea.vmem %s8, %s859
        %p861 = scmp.lt.s32.totalorder %s34, 3
        %s862 = scalar_select %p861, %s34, 3
        %s863 = smul.addr %s862, 4
        %s864 = smul.addr %s863, 8
        %s865 = scalar_lea.vmem %s9, %s864
        %p866 = scmp.lt.s32.totalorder %s34, 3
        %s867 = scalar_select %p866, %s34, 3
        %s868 = scalar_lea.vmem %s10, %s867
        %p869 = scmp.lt.s32.totalorder %s34, 3
        %s870 = scalar_select %p869, %s34, 3
        %s871 = smul.addr %s870, 8
        %s872 = scalar_lea.vmem %s11, %s871
        %p873 = scmp.eq.s32.totalorder %s34, 0
        // Predicated region
        $region77: #{tpu_custom_call.1} parent=75 // pred_check
          %p874 = pneg %p873
        $region78: #{tpu_custom_call.1} parent=75 // pred_check_branch
          %876 = sbr.rel (%p874) target = $region80
        $region79: #{tpu_custom_call.1} parent=75 // pred_region
          %vm877 = vcmask 261120
          %878 = vst.msk [vmem:[#allocation2] sm:$0xff] %vm877, 0.0
        $region80: #{tpu_custom_call.1} parent=75 // pred_fallthru
          _
        %v879 = vld [vmem:[%s768] sm:$0xff]
        %v880 = vld [vmem:[%s849] sm:$0xff]
        %v881 = vld [vmem:[%s849 + $0x8] sm:$0xff]
        %v882 = vld [vmem:[%s849 + $0x10] sm:$0xff]
        %v883 = vld [vmem:[%s849 + $0x18] sm:$0xff]
        %v884 = vld [vmem:[%s852] sm:$0x1]
        %v886 = vperm.slane %v884, 0
        %vm888 = vcmask 261120
        %v890 = vsel %vm888, %v879, 0
        %892 = vmatpush.msra.mxu0 0.0
        %893 = vmatpush.msra.mxu0 0.0
        %894 = vmatpush.msra.mxu0 0.0
        %895 = vmatpush.msra.mxu0 0.0
        %896 = vmatpush.msra.mxu0 0.0
        %897 = vmatpush.msra.mxu0 0.0
        %898 = vmatpush.msra.mxu0 0.0
        %899 = vmatpush.msra.mxu0 0.0
        %900 = vmatpush.msra.mxu0 0.0
        %901 = vmatpush.msra.mxu0 0.0
        %902 = vmatpush.msra.mxu0 0.0
        %903 = vmatpush.msra.mxu0 0.0
        %904 = vmatpush.msra.mxu0 %v883
        %905 = vmatpush.msra.mxu0 %v882
        %906 = vmatpush.msra.mxu0 %v881
        %907 = vmatpush.msra.mxu0 %v880
        %908 = vmatmul.f32.gmra.mxu0 %v890
        %v909 = vpop.f32.mrf.mxu0
        %v910 = vadd.f32 %v886, %v909
        %911 = vdwg.mxu0
        %v912 = vld [vmem:[%s772] sm:$0xff]
        %v913 = vld [vmem:[%s857] sm:$0xff]
        %v914 = vld [vmem:[%s857 + $0x8] sm:$0xff]
        %v915 = vld [vmem:[%s857 + $0x10] sm:$0xff]
        %v916 = vld [vmem:[%s857 + $0x18] sm:$0xff]
        %v917 = vld [vmem:[%s860] sm:$0x1]
        %v919 = vperm.slane %v917, 0
        %v922 = vsel %vm888, %v912, 0
        %924 = vmatpush.msra.mxu0 0.0
        %925 = vmatpush.msra.mxu0 0.0
        %926 = vmatpush.msra.mxu0 0.0
        %927 = vmatpush.msra.mxu0 0.0
        %928 = vmatpush.msra.mxu0 0.0
        %929 = vmatpush.msra.mxu0 0.0
        %930 = vmatpush.msra.mxu0 0.0
        %931 = vmatpush.msra.mxu0 0.0
        %932 = vmatpush.msra.mxu0 0.0
        %933 = vmatpush.msra.mxu0 0.0
        %934 = vmatpush.msra.mxu0 0.0
        %935 = vmatpush.msra.mxu0 0.0
        %936 = vmatpush.msra.mxu0 %v916
        %937 = vmatpush.msra.mxu0 %v915
        %938 = vmatpush.msra.mxu0 %v914
        %939 = vmatpush.msra.mxu0 %v913
        %940 = vmatmul.f32.gmra.mxu0 %v922
        %v941 = vpop.f32.mrf.mxu0
        %v942 = vadd.f32 %v919, %v941
        %943 = vdwg.mxu0
        %v944 = vld [vmem:[%s776] sm:$0xff]
        %v945 = vld [vmem:[%s865] sm:$0xff]
        %v946 = vld [vmem:[%s865 + $0x8] sm:$0xff]
        %v947 = vld [vmem:[%s865 + $0x10] sm:$0xff]
        %v948 = vld [vmem:[%s865 + $0x18] sm:$0xff]
        %v949 = vld [vmem:[%s868] sm:$0x1]
        %v951 = vperm.slane %v949, 0
        %v954 = vsel %vm888, %v944, 0
        %956 = vmatpush.msra.mxu0 0.0
        %957 = vmatpush.msra.mxu0 0.0
        %958 = vmatpush.msra.mxu0 0.0
        %959 = vmatpush.msra.mxu0 0.0
        %960 = vmatpush.msra.mxu0 0.0
        %961 = vmatpush.msra.mxu0 0.0
        %962 = vmatpush.msra.mxu0 0.0
        %963 = vmatpush.msra.mxu0 0.0
        %964 = vmatpush.msra.mxu0 0.0
        %965 = vmatpush.msra.mxu0 0.0
        %966 = vmatpush.msra.mxu0 0.0
        %967 = vmatpush.msra.mxu0 0.0
        %968 = vmatpush.msra.mxu0 %v948
        %969 = vmatpush.msra.mxu0 %v947
        %970 = vmatpush.msra.mxu0 %v946
        %971 = vmatpush.msra.mxu0 %v945
        %972 = vmatmul.f32.gmra.mxu0 %v954
        %v973 = vpop.f32.mrf.mxu0
        %v974 = vadd.f32 %v951, %v973
        %975 = vdwg.mxu0
        %v976 = vld [vmem:[%s795] sm:$0xff]
        %v978 = vsel %vm888, %v976, 0
        %980 = vmatpush.msra.mxu0 0.0
        %981 = vmatpush.msra.mxu0 0.0
        %982 = vmatpush.msra.mxu0 0.0
        %983 = vmatpush.msra.mxu0 0.0
        %984 = vmatpush.msra.mxu0 0.0
        %985 = vmatpush.msra.mxu0 0.0
        %986 = vmatpush.msra.mxu0 0.0
        %987 = vmatpush.msra.mxu0 0.0
        %988 = vmatpush.msra.mxu0 0.0
        %989 = vmatpush.msra.mxu0 0.0
        %990 = vmatpush.msra.mxu0 0.0
        %991 = vmatpush.msra.mxu0 0.0
        %992 = vmatpush.msra.mxu0 %v916
        %993 = vmatpush.msra.mxu0 %v915
        %994 = vmatpush.msra.mxu0 %v914
        %995 = vmatpush.msra.mxu0 %v913
        %996 = vmatmul.f32.gmra.mxu0 %v978
        %v997 = vpop.f32.mrf.mxu0
        %v998 = vadd.f32 %v919, %v997
        %999 = vdwg.mxu0
        %v1000 = vld [vmem:[%s829] sm:$0xff]
        %v1002 = vsel %vm888, %v1000, 0
        %1004 = vmatpush.msra.mxu0 0.0
        %1005 = vmatpush.msra.mxu0 0.0
        %1006 = vmatpush.msra.mxu0 0.0
        %1007 = vmatpush.msra.mxu0 0.0
        %1008 = vmatpush.msra.mxu0 0.0
        %1009 = vmatpush.msra.mxu0 0.0
        %1010 = vmatpush.msra.mxu0 0.0
        %1011 = vmatpush.msra.mxu0 0.0
        %1012 = vmatpush.msra.mxu0 0.0
        %1013 = vmatpush.msra.mxu0 0.0
        %1014 = vmatpush.msra.mxu0 0.0
        %1015 = vmatpush.msra.mxu0 0.0
        %1016 = vmatpush.msra.mxu0 %v948
        %1017 = vmatpush.msra.mxu0 %v947
        %1018 = vmatpush.msra.mxu0 %v946
        %1019 = vmatpush.msra.mxu0 %v945
        %1020 = vmatmul.f32.gmra.mxu0 %v1002
        %v1021 = vpop.f32.mrf.mxu0
        %v1022 = vadd.f32 %v951, %v1021
        %1023 = vdwg.mxu0
        %vm1024 = vcmask 64512
        %v1026 = vsel %vm1024, %v910, 0
        %v1029 = vsel %vm1024, %v942, 0
        %1031 = vmatpush.xpose.msra.mxu0 0.0
        %1032 = vmatpush.xpose.msra.mxu0 0.0
        %1033 = vmatpush.xpose.msra.mxu0 0.0
        %1034 = vmatpush.xpose.msra.mxu0 0.0
        %1035 = vmatpush.xpose.msra.mxu0 0.0
        %1036 = vmatpush.xpose.msra.mxu0 0.0
        %1037 = vmatpush.xpose.msra.mxu0 0.0
        %1038 = vmatpush.xpose.msra.mxu0 0.0
        %1039 = vmatpush.xpose.msra.mxu0 0.0
        %1040 = vmatpush.xpose.msra.mxu0 0.0
        %1041 = vmatpush.xpose.msra.mxu0 0.0
        %1042 = vmatpush.xpose.msra.mxu0 0.0
        %1043 = vmatpush.xpose.msra.mxu0 0.0
        %1044 = vmatpush.xpose.msra.mxu0 0.0
        %1045 = vmatpush.xpose.msra.mxu0 0.0
        %1046 = vmatpush.xpose.msra.mxu0 %v1029
        %1047 = vmatmul.f32.gmra.mxu0 %v1026
        %v1048 = vpop.f32.mrf.mxu0
        %v1049 = vadd.f32 0.0, %v1048
        %1050 = vdwg.mxu0
        %v1051 = vmul.f32 %v1049, 0.35355338
        %v1052 = vsel %vm1024, %v1051, -inf
        %1053 = vmax.xlane.f32.xlu0 %v1052
        %v1054 = vpop.xlane.xlu0 %1053
        %v1055 = vsub.f32 %v1051, %v1054
        %v1056 = vmul.f32 %v1055, 1.442695
        %v1057 = vpow.pop %v1056
        %v1058 = vsel %vm1024, %v1057, 0.0
        %1059 = vadd.xlane.f32.xlu0 %v1058
        %v1060 = vpop.xlane.xlu0 %1059
        %v1061 = vrcp.pop %v1060
        %v1062 = vmul.f32 %v1060, %v1061
        %v1063 = vsub.f32 1.0, %v1062
        %v1064 = vmul.f32 %v1061, %v1063
        %v1065 = vadd.f32 %v1061, %v1064
        %vm1066 = vweird.f32 %v1060
        %vm1067 = vweird.f32 %v1061
        %vm1068 = vmor %vm1066, %vm1067
        %v1069 = vsel %vm1068, %v1061, %v1065
        %v1070 = vand.u32 2147483647, %v1060
        %vm1071 = vcmp.eq.f32.partialorder %v1070, 8.507059e+37
        %v1072 = vand.u32 %v1060, 2147483648
        %v1073 = vor.u32 1.1754944e-38, %v1072
        %v1074 = vsel %vm1071, %v1073, %v1069
        %v1075 = vmul.f32 %v1057, %v1074
        %v1077 = vsel %vm1024, %v998, 0
        %1079 = vmatpush.xpose.msra.mxu0 0.0
        %1080 = vmatpush.xpose.msra.mxu0 0.0
        %1081 = vmatpush.xpose.msra.mxu0 0.0
        %1082 = vmatpush.xpose.msra.mxu0 0.0
        %1083 = vmatpush.xpose.msra.mxu0 0.0
        %1084 = vmatpush.xpose.msra.mxu0 0.0
        %1085 = vmatpush.xpose.msra.mxu0 0.0
        %1086 = vmatpush.xpose.msra.mxu0 0.0
        %1087 = vmatpush.xpose.msra.mxu0 0.0
        %1088 = vmatpush.xpose.msra.mxu0 0.0
        %1089 = vmatpush.xpose.msra.mxu0 0.0
        %1090 = vmatpush.xpose.msra.mxu0 0.0
        %1091 = vmatpush.xpose.msra.mxu0 0.0
        %1092 = vmatpush.xpose.msra.mxu0 0.0
        %1093 = vmatpush.xpose.msra.mxu0 0.0
        %1094 = vmatpush.xpose.msra.mxu0 %v1077
        %1095 = vmatmul.f32.gmra.mxu0 %v1026
        %v1096 = vpop.f32.mrf.mxu0
        %v1097 = vadd.f32 0.0, %v1096
        %1098 = vdwg.mxu0
        %v1099 = vmul.f32 %v1097, 0.35355338
        %v1100 = vsel %vm1024, %v1099, -inf
        %1101 = vmax.xlane.f32.xlu0 %v1100
        %v1102 = vpop.xlane.xlu0 %1101
        %v1103 = vsub.f32 %v1099, %v1102
        %v1104 = vmul.f32 %v1103, 1.442695
        %v1105 = vpow.pop %v1104
        %v1106 = vsel %vm1024, %v1105, 0.0
        %1107 = vadd.xlane.f32.xlu0 %v1106
        %v1108 = vpop.xlane.xlu0 %1107
        %v1109 = vrcp.pop %v1108
        %v1110 = vmul.f32 %v1108, %v1109
        %v1111 = vsub.f32 1.0, %v1110
        %v1112 = vmul.f32 %v1109, %v1111
        %v1113 = vadd.f32 %v1109, %v1112
        %vm1114 = vweird.f32 %v1108
        %vm1115 = vweird.f32 %v1109
        %vm1116 = vmor %vm1114, %vm1115
        %v1117 = vsel %vm1116, %v1109, %v1113
        %v1118 = vand.u32 2147483647, %v1108
        %vm1119 = vcmp.eq.f32.partialorder %v1118, 8.507059e+37
        %v1120 = vand.u32 %v1108, 2147483648
        %v1121 = vor.u32 1.1754944e-38, %v1120
        %v1122 = vsel %vm1119, %v1121, %v1117
        %v1123 = vmul.f32 %v1105, %v1122
        %v1125 = vsel %vm1024, %v1123, 0
        %1127 = vmatpush.msra.mxu0 0.0
        %1128 = vmatpush.msra.mxu0 0.0
        %1129 = vmatpush.msra.mxu0 0.0
        %1130 = vmatpush.msra.mxu0 0.0
        %1131 = vmatpush.msra.mxu0 0.0
        %1132 = vmatpush.msra.mxu0 0.0
        %1133 = vmatpush.msra.mxu0 0.0
        %1134 = vmatpush.msra.mxu0 0.0
        %1135 = vmatpush.msra.mxu0 0.0
        %1136 = vmatpush.msra.mxu0 0.0
        %1137 = vmatpush.msra.mxu0 0.0
        %1138 = vmatpush.msra.mxu0 0.0
        %1139 = vmatpush.msra.mxu0 0.0
        %1140 = vmatpush.msra.mxu0 0.0
        %1141 = vmatpush.msra.mxu0 0.0
        %1142 = vmatpush.msra.mxu0 %v1022
        %1143 = vmatmul.f32.gmra.mxu0 %v1125
        %v1144 = vpop.f32.mrf.mxu0
        %v1145 = vadd.f32 0.0, %v1144
        %1146 = vdwg.mxu0
        %v1147 = vmax.f32 %v1145, 0.0
        %v1148 = vmul.f32 %v1147, 0.5
        %v1150 = vsel %vm1024, %v1075, 0
        %1152 = vmatpush.msra.mxu0 0.0
        %1153 = vmatpush.msra.mxu0 0.0
        %1154 = vmatpush.msra.mxu0 0.0
        %1155 = vmatpush.msra.mxu0 0.0
        %1156 = vmatpush.msra.mxu0 0.0
        %1157 = vmatpush.msra.mxu0 0.0
        %1158 = vmatpush.msra.mxu0 0.0
        %1159 = vmatpush.msra.mxu0 0.0
        %1160 = vmatpush.msra.mxu0 0.0
        %1161 = vmatpush.msra.mxu0 0.0
        %1162 = vmatpush.msra.mxu0 0.0
        %1163 = vmatpush.msra.mxu0 0.0
        %1164 = vmatpush.msra.mxu0 0.0
        %1165 = vmatpush.msra.mxu0 0.0
        %1166 = vmatpush.msra.mxu0 0.0
        %1167 = vmatpush.msra.mxu0 %v974
        %1168 = vmatmul.f32.gmra.mxu0 %v1150
        %v1169 = vpop.f32.mrf.mxu0
        %v1170 = vadd.f32 %v1148, %v1169
        %1171 = vdwg.mxu0
        %v1172 = vld [vmem:[#allocation2] sm:$0xff]
        %v1173 = vld [vmem:[%s872] sm:$0xff]
        %v1175 = vsel %vm1024, %v1170, 0
        %1177 = vmatpush.msra.mxu0 0.0
        %1178 = vmatpush.msra.mxu0 0.0
        %1179 = vmatpush.msra.mxu0 0.0
        %1180 = vmatpush.msra.mxu0 0.0
        %1181 = vmatpush.msra.mxu0 0.0
        %1182 = vmatpush.msra.mxu0 0.0
        %1183 = vmatpush.msra.mxu0 0.0
        %1184 = vmatpush.msra.mxu0 0.0
        %1185 = vmatpush.msra.mxu0 0.0
        %1186 = vmatpush.msra.mxu0 0.0
        %1187 = vmatpush.msra.mxu0 0.0
        %1188 = vmatpush.msra.mxu0 0.0
        %1189 = vmatpush.msra.mxu0 0.0
        %1190 = vmatpush.msra.mxu0 0.0
        %1191 = vmatpush.msra.mxu0 0.0
        %1192 = vmatpush.msra.mxu0 %v1173
        %1193 = vmatmul.f32.gmra.mxu0 %v1175
        %v1194 = vpop.f32.mrf.mxu0
        %v1195 = vadd.f32 0.0, %v1194
        %1196 = vdwg.mxu0
        %v1197 = vadd.f32 %v1172, %v1195
        %1198 = vst.msk [vmem:[#allocation2] sm:$0xff] %vm888, %v1197
        %p1199 = scmp.eq.s32.totalorder %s34, 3
        // Predicated region
        $region81: #{tpu_custom_call.1} parent=75 // pred_check
          %p1200 = pneg %p1199
        $region82: #{tpu_custom_call.1} parent=75 // pred_check_branch
          %1202 = sbr.rel (%p1200) target = $region84
        $region83: #{tpu_custom_call.1} parent=75 // pred_region
          %v1203 = vld [vmem:[#allocation2] sm:$0xff]
          %v1204 = vld [vmem:[%s12] sm:$0x1]
          %v1206 = vperm.slane %v1204, 0
          %v1208 = vadd.f32 %v1203, %v1206
          %1209 = vst.msk [vmem:[%s764] sm:$0xff] %vm888, %v1208
        $region84: #{tpu_custom_call.1} parent=75 // pred_fallthru
          _
        %s1210 = sand.u32 %s463, 1
        %s1211 = scalar_lea.sflag [#allocation5], %s1210
        %s1212 = sand.u32 %s463, 1
        %s1213 = smul.addr %s1212, 8
        %s1214 = scalar_lea.vmem [#allocation4], %s1213
        // Predicated region
        $region85: #{tpu_custom_call.1} parent=75 // pred_check
          %p1215 = pneg %p473
        $region86: #{tpu_custom_call.1} parent=75 // pred_check_branch
          %1217 = sbr.rel (%p1215) target = $region88
        $region87: #{tpu_custom_call.1} parent=75 // pred_region
          %1219 = vsyncadd %s1211, 0
          %s1220 = smul.addr %s33, 8
          %s1221 = scalar_lea.hbm %s14, %s1220
          %s1223 = sshll.u32 %s1214, 4
          %s1224 = int_to_ptr.vmem [resolvable:$true] %s1223
          %s1225 = sshll.u32 %s1221, 4
          %s1226 = int_to_ptr.hbm [resolvable:$true] %s1225
          %1228 = dma.vmem_to_hbm [thread:$0]  %s1224, 128, %s1226, %s1211
        $region88: #{tpu_custom_call.1} parent=75 // pred_fallthru
          _
      $region76: #{tpu_custom_call.1} parent=5 // pred_fallthru
        _
      %p1229 = scmp.le.s32.totalorder 2, %s24
      // Predicated region
      $region89: #{tpu_custom_call.1} parent=5 // pred_check
        %p1230 = pneg %p1229
      $region90: #{tpu_custom_call.1} parent=5 // pred_check_branch
        %1232 = sbr.rel (%p1230) target = $region92
      $region91: #{tpu_custom_call.1} parent=5 // pred_region
        %s1233 = ssub.s32 %s24, 2
        // Predicated region
        $region93: #{tpu_custom_call.1} parent=91 // pred_check
          %p1234 = pneg %p479
        $region94: #{tpu_custom_call.1} parent=91 // pred_check_branch
          %1236 = sbr.rel (%p1234) target = $region96
        $region95: #{tpu_custom_call.1} parent=91 // pred_region
          %s1237 = sand.u32 %s464, 1
          %s1238 = scalar_lea.sflag [#allocation5], %s1237
          %s1239 = sand.u32 %s464, 1
          %s1240 = smul.addr %s1239, 8
          %s1241 = scalar_lea.vmem [#allocation4], %s1240
          %1243 = dma.done %s1238, 128
        $region96: #{tpu_custom_call.1} parent=91 // pred_fallthru
          _
      $region92: #{tpu_custom_call.1} parent=5 // pred_fallthru
        _
    $region6: #{tpu_custom_call.1} parent=1 // loop_footer
      %s28 = sadd.s32 1, %s24
    $region7: #{tpu_custom_call.1} parent=1 // loop_footer_branch
      %23 = sbr.rel target = $region3
    $region8: #{tpu_custom_call.1} parent=1 // loop_exit
      _
    %1244 = vsyncpa [#allocation5], 1
    %s1245 = scalar_lea.sflag [#allocation5], 1
    %1246 = vsyncpa %s1245, 1

</llo_original>
